<compile_context>
chip_gen: v7x
topology: tpu7x:2x2x1
jax: 0.10.0
libtpu: 0.0.40
codegen_flags: <defaults>
</compile_context>

<pallas_src>
import functools

import jax
import jax.numpy as jnp
import numpy as np
from jax import lax
from jax.experimental import pallas as pl
from jax.experimental.pallas import tpu as pltpu

LN_EPS = 1e-5                       # PyTorch nn.LayerNorm default eps
_INV_SQRT2 = 0.7071067811865476


# ---------------------------------------------------------------------------
# Fused transformer-block kernel: one invocation processes all B*N tokens.
# ---------------------------------------------------------------------------
def _block_kernel(x_ref, g1_ref, b1_ref, wqkv_ref, wproj_ref, bproj_ref,
                  g2_ref, b2_ref, wfc1_ref, bfc1_ref, wfc2_ref, bfc2_ref,
                  o_ref, qkv_s, y_s, *, batch, seq, num_heads, scale):
    C = x_ref.shape[-1]
    hd = C // num_heads
    x = x_ref[...]                                            # (B*N, C) f32

    # ---- LayerNorm 1 (affine, eps=1e-5), f32 math ----
    mu = jnp.mean(x, axis=-1, keepdims=True)
    xc = x - mu
    var = jnp.mean(xc * xc, axis=-1, keepdims=True)
    xn = xc * lax.rsqrt(var + LN_EPS) * g1_ref[...] + b1_ref[...]

    # ---- qkv projection (qkv_bias=False): M = B*N rows, bf16 x bf16 -> f32 acc
    qkv_s[...] = jnp.dot(xn.astype(jnp.bfloat16), wqkv_ref[...],
                         preferred_element_type=jnp.float32)  # (B*N, 3C)

    # ---- per-sample / per-head softmax attention; heads concat into y_s ----
    # (static Python loops: B*heads is small; q/k/v are static Ref slices)
    for b in range(batch):
        r0 = b * seq
        for h in range(num_heads):
            c0 = h * hd
            q = qkv_s[r0:r0 + seq, c0:c0 + hd]                    # (N, hd)
            k = qkv_s[r0:r0 + seq, C + c0:C + c0 + hd]
            v = qkv_s[r0:r0 + seq, 2 * C + c0:2 * C + c0 + hd]
            s = jnp.dot(q, k.T, preferred_element_type=jnp.float32) * scale
            s = s - jnp.max(s, axis=-1, keepdims=True)            # stable softmax
            p = jnp.exp(s)
            inv = pl.reciprocal(jnp.sum(p, axis=-1, keepdims=True), approx=True)
            o_h = jnp.dot(p, v, preferred_element_type=jnp.float32) * inv
            y_s[r0:r0 + seq, c0:c0 + hd] = o_h                    # concat heads

    # ---- single full-K output projection + residual 1 ----
    y = jnp.dot(y_s[...].astype(jnp.bfloat16), wproj_ref[...],
                preferred_element_type=jnp.float32) + bproj_ref[...]
    x = x + y

    # ---- LayerNorm 2 ----
    mu2 = jnp.mean(x, axis=-1, keepdims=True)
    xc2 = x - mu2
    var2 = jnp.mean(xc2 * xc2, axis=-1, keepdims=True)
    xn2 = xc2 * lax.rsqrt(var2 + LN_EPS) * g2_ref[...] + b2_ref[...]

    # ---- MLP: fc1 -> exact (erf) GELU in f32 -> fc2; residual 2 ----
    h1 = jnp.dot(xn2.astype(jnp.bfloat16), wfc1_ref[...],
                 preferred_element_type=jnp.float32) + bfc1_ref[...]
    h1 = 0.5 * h1 * (1.0 + lax.erf(h1 * _INV_SQRT2))
    h2 = jnp.dot(h1.astype(jnp.bfloat16), wfc2_ref[...],
                 preferred_element_type=jnp.float32) + bfc2_ref[...]

    o_ref[...] = (x + h2).astype(o_ref.dtype)


def block_forward_pallas(x, params, *, num_heads):
    """x: (B, N, C) f32 -> (B, N, C) f32. Whole Block fused in one pallas_call."""
    B, N, C = x.shape
    assert C % num_heads == 0, "dim must be divisible by num_heads"
    H = params["w_fc1"].shape[1]
    scale = (C // num_heads) ** -0.5
    BN = B * N

    # bf16 weights: halve HBM->VMEM DMA and residency (MXU is bf16-native);
    # biases / LN affine params stay f32 (added in f32 after the matmuls).
    bf16 = jnp.bfloat16
    w_qkv = params["w_qkv"].astype(bf16)
    w_proj = params["w_proj"].astype(bf16)
    w_fc1 = params["w_fc1"].astype(bf16)
    w_fc2 = params["w_fc2"].astype(bf16)

    # VMEM footprint (single-buffered, grid-free): bf16 weights + f32 activations
    # (x/out, qkv + head-concat scratches, fc1 hidden) + temporaries headroom.
    weight_bytes = 2 * (C * 3 * C + C * C + C * H + H * C)
    act_bytes = 4 * (2 * BN * C + BN * 3 * C + BN * C + BN * H + 4 * BN * C)
    vmem_limit = int(min(max(2 * (weight_bytes + act_bytes), 8 << 20), 64 << 20))

    kern = functools.partial(_block_kernel, batch=B, seq=N,
                             num_heads=num_heads, scale=scale)
    out = pl.pallas_call(
        kern,
        out_shape=jax.ShapeDtypeStruct((BN, C), jnp.float32),
        scratch_shapes=[pltpu.VMEM((BN, 3 * C), jnp.float32),   # qkv
                        pltpu.VMEM((BN, C), jnp.float32)],      # concat heads
        compiler_params=pltpu.CompilerParams(vmem_limit_bytes=vmem_limit),
    )(x.reshape(BN, C),
      params["ln1_g"], params["ln1_b"], w_qkv, w_proj, params["b_proj"],
      params["ln2_g"], params["ln2_b"], w_fc1, params["b_fc1"],
      w_fc2, params["b_fc2"])
    return out.reshape(B, N, C)


# ---------------------------------------------------------------------------
# Pure-JAX reference (mirrors the PyTorch forward, eval-mode dropout)
# ---------------------------------------------------------------------------
def block_forward_ref(x, params, *, num_heads):
    B, N, C = x.shape
    hd = C // num_heads
    scale = hd ** -0.5

    def ln(v, g, b):
        mu = jnp.mean(v, axis=-1, keepdims=True)
        var = jnp.mean(jnp.square(v - mu), axis=-1, keepdims=True)
        return (v - mu) * lax.rsqrt(var + LN_EPS) * g + b

    xn = ln(x, params["ln1_g"], params["ln1_b"])
    qkv = xn @ params["w_qkv"]                                 # (B, N, 3C)
    qkv = qkv.reshape(B, N, 3, num_heads, hd).transpose(2, 0, 3, 1, 4)
    q, k, v = qkv[0], qkv[1], qkv[2]                           # (B, H, N, hd)
    attn = jnp.einsum("bhnd,bhmd->bhnm", q, k) * scale
    attn = jax.nn.softmax(attn, axis=-1)
    y = jnp.einsum("bhnm,bhmd->bhnd", attn, v)
    y = y.transpose(0, 2, 1, 3).reshape(B, N, C)
    y = y @ params["w_proj"] + params["b_proj"]
    x = x + y

    xn2 = ln(x, params["ln2_g"], params["ln2_b"])
    h = xn2 @ params["w_fc1"] + params["b_fc1"]
    h = 0.5 * h * (1.0 + lax.erf(h * _INV_SQRT2))
    h = h @ params["w_fc2"] + params["b_fc2"]
    return x + h


# ---------------------------------------------------------------------------
# Deterministic parameter init (weights stored as (in, out); x @ W matches
# PyTorch's x @ W_torch.T, i.e. these are the transposed nn.Linear weights)
# ---------------------------------------------------------------------------
def init_params(key, dim, num_heads, mlp_ratio=4.0):
    H = int(dim * mlp_ratio)
    ks = jax.random.split(key, 10)
    f32 = jnp.float32
    return {
        "ln1_g": 1.0 + 0.1 * jax.random.normal(ks[0], (1, dim), f32),
        "ln1_b": 0.1 * jax.random.normal(ks[1], (1, dim), f32),
        "w_qkv": 0.1 * jax.random.normal(ks[2], (dim, 3 * dim), f32),
        "w_proj": 0.1 * jax.random.normal(ks[3], (dim, dim), f32),
        "b_proj": 0.1 * jax.random.normal(ks[4], (1, dim), f32),
        "ln2_g": 1.0 + 0.1 * jax.random.normal(ks[5], (1, dim), f32),
        "ln2_b": 0.1 * jax.random.normal(ks[6], (1, dim), f32),
        "w_fc1": 0.1 * jax.random.normal(ks[7], (dim, H), f32),
        "b_fc1": 0.1 * jax.random.normal(ks[8], (1, H), f32),
        "w_fc2": 0.1 * jax.random.normal(ks[9], (H, dim), f32),
        "b_fc2": jnp.zeros((1, dim), f32),
    }


if __name__ == "__main__":
    key = jax.random.PRNGKey(0)
    kp, kx = jax.random.split(key)

    # Small shapes: batch=2, seq=8, dim=32, heads=4 (head_dim=8), mlp hidden=128.
    # NOTE: C=32 < 128 lanes means masked stores on the toy test; real ViT dims
    # (C a multiple of 128) are lane-dense with this same kernel.
    B, N, C, HEADS = 2, 8, 32, 4
    params = init_params(kp, C, HEADS)
    x = jax.random.normal(kx, (B, N, C), jnp.float32)

    fwd = jax.jit(functools.partial(block_forward_pallas, num_heads=HEADS))
    out = jax.block_until_ready(fwd(x, params))
    assert out.shape == (B, N, C), out.shape

    ref = jax.block_until_ready(
        jax.jit(functools.partial(block_forward_ref, num_heads=HEADS))(x, params))
    # Tolerance reflects the deliberate bf16-weight / bf16-operand MXU path.
    np.testing.assert_allclose(np.asarray(out), np.asarray(ref),
                               rtol=1e-2, atol=1e-2)

    print("KERNEL_OK")
</pallas_src>

<mosaic_0001>
module attributes {stable_mosaic.version = 11 : i64} {
  func.func @_block_kernel(%arg0: memref<16x32xf32, #tpu.memory_space<vmem>>, %arg1: memref<1x32xf32, #tpu.memory_space<vmem>>, %arg2: memref<1x32xf32, #tpu.memory_space<vmem>>, %arg3: memref<32x96xbf16, #tpu.memory_space<vmem>>, %arg4: memref<32x32xbf16, #tpu.memory_space<vmem>>, %arg5: memref<1x32xf32, #tpu.memory_space<vmem>>, %arg6: memref<1x32xf32, #tpu.memory_space<vmem>>, %arg7: memref<1x32xf32, #tpu.memory_space<vmem>>, %arg8: memref<32x128xbf16, #tpu.memory_space<vmem>>, %arg9: memref<1x128xf32, #tpu.memory_space<vmem>>, %arg10: memref<128x32xbf16, #tpu.memory_space<vmem>>, %arg11: memref<1x32xf32, #tpu.memory_space<vmem>>, %arg12: memref<16x32xf32, #tpu.memory_space<vmem>>, %arg13: memref<16x96xf32, #tpu.memory_space<vmem>>, %arg14: memref<16x32xf32, #tpu.memory_space<vmem>>) attributes {dimension_semantics = [], scalar_prefetch = 0 : i64, scratch_operands = 2 : i64, tpu.core_type = #tpu.core_type<tc>} {
    %c0 = arith.constant 0 : index
    %c0_0 = arith.constant 0 : index
    %0 = vector.load %arg0[%c0, %c0_0] : memref<16x32xf32, #tpu.memory_space<vmem>>, vector<16x32xf32>
    %cst = arith.constant dense<0.000000e+00> : vector<16xf32>
    %1 = vector.multi_reduction <add>, %0, %cst [1] : vector<16x32xf32> to vector<16xf32>
    %2 = vector.shape_cast %1 : vector<16xf32> to vector<16x1xf32>
    %cst_1 = arith.constant 3.200000e+01 : f32
    %3 = vector.broadcast %cst_1 : f32 to vector<16x1xf32>
    %4 = arith.divf %2, %3 : vector<16x1xf32>
    %5 = vector.broadcast %4 : vector<16x1xf32> to vector<16x32xf32>
    %6 = arith.subf %0, %5 : vector<16x32xf32>
    %7 = arith.mulf %6, %6 : vector<16x32xf32>
    %cst_2 = arith.constant dense<0.000000e+00> : vector<16xf32>
    %8 = vector.multi_reduction <add>, %7, %cst_2 [1] : vector<16x32xf32> to vector<16xf32>
    %9 = vector.shape_cast %8 : vector<16xf32> to vector<16x1xf32>
    %cst_3 = arith.constant 3.200000e+01 : f32
    %10 = vector.broadcast %cst_3 : f32 to vector<16x1xf32>
    %11 = arith.divf %9, %10 : vector<16x1xf32>
    %cst_4 = arith.constant 9.99999974E-6 : f32
    %12 = vector.broadcast %cst_4 : f32 to vector<16x1xf32>
    %13 = arith.addf %11, %12 : vector<16x1xf32>
    %14 = math.rsqrt %13 : vector<16x1xf32>
    %15 = vector.broadcast %14 : vector<16x1xf32> to vector<16x32xf32>
    %16 = arith.mulf %6, %15 : vector<16x32xf32>
    %c0_5 = arith.constant 0 : index
    %c0_6 = arith.constant 0 : index
    %17 = vector.load %arg1[%c0_5, %c0_6] : memref<1x32xf32, #tpu.memory_space<vmem>>, vector<1x32xf32>
    %18 = vector.broadcast %17 : vector<1x32xf32> to vector<16x32xf32>
    %19 = arith.mulf %16, %18 : vector<16x32xf32>
    %c0_7 = arith.constant 0 : index
    %c0_8 = arith.constant 0 : index
    %20 = vector.load %arg2[%c0_7, %c0_8] : memref<1x32xf32, #tpu.memory_space<vmem>>, vector<1x32xf32>
    %21 = vector.broadcast %20 : vector<1x32xf32> to vector<16x32xf32>
    %22 = arith.addf %19, %21 : vector<16x32xf32>
    %23 = arith.truncf %22 : vector<16x32xf32> to vector<16x32xbf16>
    %c0_9 = arith.constant 0 : index
    %c0_10 = arith.constant 0 : index
    %24 = vector.load %arg3[%c0_9, %c0_10] : memref<32x96xbf16, #tpu.memory_space<vmem>>, vector<32x96xbf16>
    %cst_11 = arith.constant dense<0.000000e+00> : vector<16x96xf32>
    %25 = tpu.matmul %23, %24, %cst_11 {dimension_numbers = #tpu.dot_dimension_numbers<[1], [0], [0], [1], [0, 0, 1, 1], [], []>} : vector<16x32xbf16>, vector<32x96xbf16>, vector<16x96xf32> -> vector<16x96xf32>
    %c0_12 = arith.constant 0 : index
    %c0_13 = arith.constant 0 : index
    %26 = vector.load %arg13[%c0_12, %c0_13] : memref<16x96xf32, #tpu.memory_space<vmem>>, vector<16x96xf32>
    tpu.vector_store %arg13[%c0_12, %c0_13], %25 {strides = array<i32>} : memref<16x96xf32, #tpu.memory_space<vmem>>, vector<16x96xf32>,
    %c0_14 = arith.constant 0 : index
    %c0_15 = arith.constant 0 : index
    %27 = vector.load %arg13[%c0_14, %c0_15] : memref<16x96xf32, #tpu.memory_space<vmem>>, vector<8x8xf32>
    %c0_16 = arith.constant 0 : index
    %c32 = arith.constant 32 : index
    %28 = vector.load %arg13[%c0_16, %c32] : memref<16x96xf32, #tpu.memory_space<vmem>>, vector<8x8xf32>
    %c0_17 = arith.constant 0 : index
    %c64 = arith.constant 64 : index
    %29 = vector.load %arg13[%c0_17, %c64] : memref<16x96xf32, #tpu.memory_space<vmem>>, vector<8x8xf32>
    %30 = tpu.transpose %28, [1, 0] : vector<8x8xf32> -> vector<8x8xf32>
    %cst_18 = arith.constant dense<0.000000e+00> : vector<8x8xf32>
    %31 = tpu.matmul %27, %30, %cst_18 {dimension_numbers = #tpu.dot_dimension_numbers<[1], [0], [0], [1], [0, 0, 1, 1], [], []>} : vector<8x8xf32>, vector<8x8xf32>, vector<8x8xf32> -> vector<8x8xf32>
    %cst_19 = arith.constant 0.353553385 : f32
    %32 = vector.broadcast %cst_19 : f32 to vector<8x8xf32>
    %33 = arith.mulf %31, %32 : vector<8x8xf32>
    %cst_20 = arith.constant dense<0xFF800000> : vector<8xf32>
    %34 = vector.multi_reduction <maximumf>, %33, %cst_20 [1] : vector<8x8xf32> to vector<8xf32>
    %35 = vector.shape_cast %34 : vector<8xf32> to vector<8x1xf32>
    %36 = vector.broadcast %35 : vector<8x1xf32> to vector<8x8xf32>
    %37 = arith.subf %33, %36 : vector<8x8xf32>
    %38 = math.exp %37 : vector<8x8xf32>
    %cst_21 = arith.constant dense<0.000000e+00> : vector<8xf32>
    %39 = vector.multi_reduction <add>, %38, %cst_21 [1] : vector<8x8xf32> to vector<8xf32>
    %40 = vector.shape_cast %39 : vector<8xf32> to vector<8x1xf32>
    %41 = tpu.reciprocal %40 {approx = true} : vector<8x1xf32> -> vector<8x1xf32>
    %cst_22 = arith.constant dense<0.000000e+00> : vector<8x8xf32>
    %42 = tpu.matmul %38, %29, %cst_22 {dimension_numbers = #tpu.dot_dimension_numbers<[1], [0], [0], [1], [0, 0, 1, 1], [], []>} : vector<8x8xf32>, vector<8x8xf32>, vector<8x8xf32> -> vector<8x8xf32>
    %43 = vector.broadcast %41 : vector<8x1xf32> to vector<8x8xf32>
    %44 = arith.mulf %42, %43 : vector<8x8xf32>
    %c0_23 = arith.constant 0 : index
    %c0_24 = arith.constant 0 : index
    %45 = vector.load %arg14[%c0_23, %c0_24] : memref<16x32xf32, #tpu.memory_space<vmem>>, vector<8x8xf32>
    tpu.vector_store %arg14[%c0_23, %c0_24], %44 {strides = array<i32>} : memref<16x32xf32, #tpu.memory_space<vmem>>, vector<8x8xf32>,
    %c0_25 = arith.constant 0 : index
    %c8 = arith.constant 8 : index
    %46 = vector.load %arg13[%c0_25, %c8] : memref<16x96xf32, #tpu.memory_space<vmem>>, vector<8x8xf32>
    %c0_26 = arith.constant 0 : index
    %c40 = arith.constant 40 : index
    %47 = vector.load %arg13[%c0_26, %c40] : memref<16x96xf32, #tpu.memory_space<vmem>>, vector<8x8xf32>
    %c0_27 = arith.constant 0 : index
    %c72 = arith.constant 72 : index
    %48 = vector.load %arg13[%c0_27, %c72] : memref<16x96xf32, #tpu.memory_space<vmem>>, vector<8x8xf32>
    %49 = tpu.transpose %47, [1, 0] : vector<8x8xf32> -> vector<8x8xf32>
    %cst_28 = arith.constant dense<0.000000e+00> : vector<8x8xf32>
    %50 = tpu.matmul %46, %49, %cst_28 {dimension_numbers = #tpu.dot_dimension_numbers<[1], [0], [0], [1], [0, 0, 1, 1], [], []>} : vector<8x8xf32>, vector<8x8xf32>, vector<8x8xf32> -> vector<8x8xf32>
    %cst_29 = arith.constant 0.353553385 : f32
    %51 = vector.broadcast %cst_29 : f32 to vector<8x8xf32>
    %52 = arith.mulf %50, %51 : vector<8x8xf32>
    %cst_30 = arith.constant dense<0xFF800000> : vector<8xf32>
    %53 = vector.multi_reduction <maximumf>, %52, %cst_30 [1] : vector<8x8xf32> to vector<8xf32>
    %54 = vector.shape_cast %53 : vector<8xf32> to vector<8x1xf32>
    %55 = vector.broadcast %54 : vector<8x1xf32> to vector<8x8xf32>
    %56 = arith.subf %52, %55 : vector<8x8xf32>
    %57 = math.exp %56 : vector<8x8xf32>
    %cst_31 = arith.constant dense<0.000000e+00> : vector<8xf32>
    %58 = vector.multi_reduction <add>, %57, %cst_31 [1] : vector<8x8xf32> to vector<8xf32>
    %59 = vector.shape_cast %58 : vector<8xf32> to vector<8x1xf32>
    %60 = tpu.reciprocal %59 {approx = true} : vector<8x1xf32> -> vector<8x1xf32>
    %cst_32 = arith.constant dense<0.000000e+00> : vector<8x8xf32>
    %61 = tpu.matmul %57, %48, %cst_32 {dimension_numbers = #tpu.dot_dimension_numbers<[1], [0], [0], [1], [0, 0, 1, 1], [], []>} : vector<8x8xf32>, vector<8x8xf32>, vector<8x8xf32> -> vector<8x8xf32>
    %62 = vector.broadcast %60 : vector<8x1xf32> to vector<8x8xf32>
    %63 = arith.mulf %61, %62 : vector<8x8xf32>
    %c0_33 = arith.constant 0 : index
    %c8_34 = arith.constant 8 : index
    %64 = vector.load %arg14[%c0_33, %c8_34] : memref<16x32xf32, #tpu.memory_space<vmem>>, vector<8x8xf32>
    tpu.vector_store %arg14[%c0_33, %c8_34], %63 {strides = array<i32>} : memref<16x32xf32, #tpu.memory_space<vmem>>, vector<8x8xf32>,
    %c0_35 = arith.constant 0 : index
    %c16 = arith.constant 16 : index
    %65 = vector.load %arg13[%c0_35, %c16] : memref<16x96xf32, #tpu.memory_space<vmem>>, vector<8x8xf32>
    %c0_36 = arith.constant 0 : index
    %c48 = arith.constant 48 : index
    %66 = vector.load %arg13[%c0_36, %c48] : memref<16x96xf32, #tpu.memory_space<vmem>>, vector<8x8xf32>
    %c0_37 = arith.constant 0 : index
    %c80 = arith.constant 80 : index
    %67 = vector.load %arg13[%c0_37, %c80] : memref<16x96xf32, #tpu.memory_space<vmem>>, vector<8x8xf32>
    %68 = tpu.transpose %66, [1, 0] : vector<8x8xf32> -> vector<8x8xf32>
    %cst_38 = arith.constant dense<0.000000e+00> : vector<8x8xf32>
    %69 = tpu.matmul %65, %68, %cst_38 {dimension_numbers = #tpu.dot_dimension_numbers<[1], [0], [0], [1], [0, 0, 1, 1], [], []>} : vector<8x8xf32>, vector<8x8xf32>, vector<8x8xf32> -> vector<8x8xf32>
    %cst_39 = arith.constant 0.353553385 : f32
    %70 = vector.broadcast %cst_39 : f32 to vector<8x8xf32>
    %71 = arith.mulf %69, %70 : vector<8x8xf32>
    %cst_40 = arith.constant dense<0xFF800000> : vector<8xf32>
    %72 = vector.multi_reduction <maximumf>, %71, %cst_40 [1] : vector<8x8xf32> to vector<8xf32>
    %73 = vector.shape_cast %72 : vector<8xf32> to vector<8x1xf32>
    %74 = vector.broadcast %73 : vector<8x1xf32> to vector<8x8xf32>
    %75 = arith.subf %71, %74 : vector<8x8xf32>
    %76 = math.exp %75 : vector<8x8xf32>
    %cst_41 = arith.constant dense<0.000000e+00> : vector<8xf32>
    %77 = vector.multi_reduction <add>, %76, %cst_41 [1] : vector<8x8xf32> to vector<8xf32>
    %78 = vector.shape_cast %77 : vector<8xf32> to vector<8x1xf32>
    %79 = tpu.reciprocal %78 {approx = true} : vector<8x1xf32> -> vector<8x1xf32>
    %cst_42 = arith.constant dense<0.000000e+00> : vector<8x8xf32>
    %80 = tpu.matmul %76, %67, %cst_42 {dimension_numbers = #tpu.dot_dimension_numbers<[1], [0], [0], [1], [0, 0, 1, 1], [], []>} : vector<8x8xf32>, vector<8x8xf32>, vector<8x8xf32> -> vector<8x8xf32>
    %81 = vector.broadcast %79 : vector<8x1xf32> to vector<8x8xf32>
    %82 = arith.mulf %80, %81 : vector<8x8xf32>
    %c0_43 = arith.constant 0 : index
    %c16_44 = arith.constant 16 : index
    %83 = vector.load %arg14[%c0_43, %c16_44] : memref<16x32xf32, #tpu.memory_space<vmem>>, vector<8x8xf32>
    tpu.vector_store %arg14[%c0_43, %c16_44], %82 {strides = array<i32>} : memref<16x32xf32, #tpu.memory_space<vmem>>, vector<8x8xf32>,
    %c0_45 = arith.constant 0 : index
    %c24 = arith.constant 24 : index
    %84 = vector.load %arg13[%c0_45, %c24] : memref<16x96xf32, #tpu.memory_space<vmem>>, vector<8x8xf32>
    %c0_46 = arith.constant 0 : index
    %c56 = arith.constant 56 : index
    %85 = vector.load %arg13[%c0_46, %c56] : memref<16x96xf32, #tpu.memory_space<vmem>>, vector<8x8xf32>
    %c0_47 = arith.constant 0 : index
    %c88 = arith.constant 88 : index
    %86 = vector.load %arg13[%c0_47, %c88] : memref<16x96xf32, #tpu.memory_space<vmem>>, vector<8x8xf32>
    %87 = tpu.transpose %85, [1, 0] : vector<8x8xf32> -> vector<8x8xf32>
    %cst_48 = arith.constant dense<0.000000e+00> : vector<8x8xf32>
    %88 = tpu.matmul %84, %87, %cst_48 {dimension_numbers = #tpu.dot_dimension_numbers<[1], [0], [0], [1], [0, 0, 1, 1], [], []>} : vector<8x8xf32>, vector<8x8xf32>, vector<8x8xf32> -> vector<8x8xf32>
    %cst_49 = arith.constant 0.353553385 : f32
    %89 = vector.broadcast %cst_49 : f32 to vector<8x8xf32>
    %90 = arith.mulf %88, %89 : vector<8x8xf32>
    %cst_50 = arith.constant dense<0xFF800000> : vector<8xf32>
    %91 = vector.multi_reduction <maximumf>, %90, %cst_50 [1] : vector<8x8xf32> to vector<8xf32>
    %92 = vector.shape_cast %91 : vector<8xf32> to vector<8x1xf32>
    %93 = vector.broadcast %92 : vector<8x1xf32> to vector<8x8xf32>
    %94 = arith.subf %90, %93 : vector<8x8xf32>
    %95 = math.exp %94 : vector<8x8xf32>
    %cst_51 = arith.constant dense<0.000000e+00> : vector<8xf32>
    %96 = vector.multi_reduction <add>, %95, %cst_51 [1] : vector<8x8xf32> to vector<8xf32>
    %97 = vector.shape_cast %96 : vector<8xf32> to vector<8x1xf32>
    %98 = tpu.reciprocal %97 {approx = true} : vector<8x1xf32> -> vector<8x1xf32>
    %cst_52 = arith.constant dense<0.000000e+00> : vector<8x8xf32>
    %99 = tpu.matmul %95, %86, %cst_52 {dimension_numbers = #tpu.dot_dimension_numbers<[1], [0], [0], [1], [0, 0, 1, 1], [], []>} : vector<8x8xf32>, vector<8x8xf32>, vector<8x8xf32> -> vector<8x8xf32>
    %100 = vector.broadcast %98 : vector<8x1xf32> to vector<8x8xf32>
    %101 = arith.mulf %99, %100 : vector<8x8xf32>
    %c0_53 = arith.constant 0 : index
    %c24_54 = arith.constant 24 : index
    %102 = vector.load %arg14[%c0_53, %c24_54] : memref<16x32xf32, #tpu.memory_space<vmem>>, vector<8x8xf32>
    tpu.vector_store %arg14[%c0_53, %c24_54], %101 {strides = array<i32>} : memref<16x32xf32, #tpu.memory_space<vmem>>, vector<8x8xf32>,
    %c8_55 = arith.constant 8 : index
    %c0_56 = arith.constant 0 : index
    %103 = vector.load %arg13[%c8_55, %c0_56] : memref<16x96xf32, #tpu.memory_space<vmem>>, vector<8x8xf32>
    %c8_57 = arith.constant 8 : index
    %c32_58 = arith.constant 32 : index
    %104 = vector.load %arg13[%c8_57, %c32_58] : memref<16x96xf32, #tpu.memory_space<vmem>>, vector<8x8xf32>
    %c8_59 = arith.constant 8 : index
    %c64_60 = arith.constant 64 : index
    %105 = vector.load %arg13[%c8_59, %c64_60] : memref<16x96xf32, #tpu.memory_space<vmem>>, vector<8x8xf32>
    %106 = tpu.transpose %104, [1, 0] : vector<8x8xf32> -> vector<8x8xf32>
    %cst_61 = arith.constant dense<0.000000e+00> : vector<8x8xf32>
    %107 = tpu.matmul %103, %106, %cst_61 {dimension_numbers = #tpu.dot_dimension_numbers<[1], [0], [0], [1], [0, 0, 1, 1], [], []>} : vector<8x8xf32>, vector<8x8xf32>, vector<8x8xf32> -> vector<8x8xf32>
    %cst_62 = arith.constant 0.353553385 : f32
    %108 = vector.broadcast %cst_62 : f32 to vector<8x8xf32>
    %109 = arith.mulf %107, %108 : vector<8x8xf32>
    %cst_63 = arith.constant dense<0xFF800000> : vector<8xf32>
    %110 = vector.multi_reduction <maximumf>, %109, %cst_63 [1] : vector<8x8xf32> to vector<8xf32>
    %111 = vector.shape_cast %110 : vector<8xf32> to vector<8x1xf32>
    %112 = vector.broadcast %111 : vector<8x1xf32> to vector<8x8xf32>
    %113 = arith.subf %109, %112 : vector<8x8xf32>
    %114 = math.exp %113 : vector<8x8xf32>
    %cst_64 = arith.constant dense<0.000000e+00> : vector<8xf32>
    %115 = vector.multi_reduction <add>, %114, %cst_64 [1] : vector<8x8xf32> to vector<8xf32>
    %116 = vector.shape_cast %115 : vector<8xf32> to vector<8x1xf32>
    %117 = tpu.reciprocal %116 {approx = true} : vector<8x1xf32> -> vector<8x1xf32>
    %cst_65 = arith.constant dense<0.000000e+00> : vector<8x8xf32>
    %118 = tpu.matmul %114, %105, %cst_65 {dimension_numbers = #tpu.dot_dimension_numbers<[1], [0], [0], [1], [0, 0, 1, 1], [], []>} : vector<8x8xf32>, vector<8x8xf32>, vector<8x8xf32> -> vector<8x8xf32>
    %119 = vector.broadcast %117 : vector<8x1xf32> to vector<8x8xf32>
    %120 = arith.mulf %118, %119 : vector<8x8xf32>
    %c8_66 = arith.constant 8 : index
    %c0_67 = arith.constant 0 : index
    %121 = vector.load %arg14[%c8_66, %c0_67] : memref<16x32xf32, #tpu.memory_space<vmem>>, vector<8x8xf32>
    tpu.vector_store %arg14[%c8_66, %c0_67], %120 {strides = array<i32>} : memref<16x32xf32, #tpu.memory_space<vmem>>, vector<8x8xf32>,
    %c8_68 = arith.constant 8 : index
    %c8_69 = arith.constant 8 : index
    %122 = vector.load %arg13[%c8_68, %c8_69] : memref<16x96xf32, #tpu.memory_space<vmem>>, vector<8x8xf32>
    %c8_70 = arith.constant 8 : index
    %c40_71 = arith.constant 40 : index
    %123 = vector.load %arg13[%c8_70, %c40_71] : memref<16x96xf32, #tpu.memory_space<vmem>>, vector<8x8xf32>
    %c8_72 = arith.constant 8 : index
    %c72_73 = arith.constant 72 : index
    %124 = vector.load %arg13[%c8_72, %c72_73] : memref<16x96xf32, #tpu.memory_space<vmem>>, vector<8x8xf32>
    %125 = tpu.transpose %123, [1, 0] : vector<8x8xf32> -> vector<8x8xf32>
    %cst_74 = arith.constant dense<0.000000e+00> : vector<8x8xf32>
    %126 = tpu.matmul %122, %125, %cst_74 {dimension_numbers = #tpu.dot_dimension_numbers<[1], [0], [0], [1], [0, 0, 1, 1], [], []>} : vector<8x8xf32>, vector<8x8xf32>, vector<8x8xf32> -> vector<8x8xf32>
    %cst_75 = arith.constant 0.353553385 : f32
    %127 = vector.broadcast %cst_75 : f32 to vector<8x8xf32>
    %128 = arith.mulf %126, %127 : vector<8x8xf32>
    %cst_76 = arith.constant dense<0xFF800000> : vector<8xf32>
    %129 = vector.multi_reduction <maximumf>, %128, %cst_76 [1] : vector<8x8xf32> to vector<8xf32>
    %130 = vector.shape_cast %129 : vector<8xf32> to vector<8x1xf32>
    %131 = vector.broadcast %130 : vector<8x1xf32> to vector<8x8xf32>
    %132 = arith.subf %128, %131 : vector<8x8xf32>
    %133 = math.exp %132 : vector<8x8xf32>
    %cst_77 = arith.constant dense<0.000000e+00> : vector<8xf32>
    %134 = vector.multi_reduction <add>, %133, %cst_77 [1] : vector<8x8xf32> to vector<8xf32>
    %135 = vector.shape_cast %134 : vector<8xf32> to vector<8x1xf32>
    %136 = tpu.reciprocal %135 {approx = true} : vector<8x1xf32> -> vector<8x1xf32>
    %cst_78 = arith.constant dense<0.000000e+00> : vector<8x8xf32>
    %137 = tpu.matmul %133, %124, %cst_78 {dimension_numbers = #tpu.dot_dimension_numbers<[1], [0], [0], [1], [0, 0, 1, 1], [], []>} : vector<8x8xf32>, vector<8x8xf32>, vector<8x8xf32> -> vector<8x8xf32>
    %138 = vector.broadcast %136 : vector<8x1xf32> to vector<8x8xf32>
    %139 = arith.mulf %137, %138 : vector<8x8xf32>
    %c8_79 = arith.constant 8 : index
    %c8_80 = arith.constant 8 : index
    %140 = vector.load %arg14[%c8_79, %c8_80] : memref<16x32xf32, #tpu.memory_space<vmem>>, vector<8x8xf32>
    tpu.vector_store %arg14[%c8_79, %c8_80], %139 {strides = array<i32>} : memref<16x32xf32, #tpu.memory_space<vmem>>, vector<8x8xf32>,
    %c8_81 = arith.constant 8 : index
    %c16_82 = arith.constant 16 : index
    %141 = vector.load %arg13[%c8_81, %c16_82] : memref<16x96xf32, #tpu.memory_space<vmem>>, vector<8x8xf32>
    %c8_83 = arith.constant 8 : index
    %c48_84 = arith.constant 48 : index
    %142 = vector.load %arg13[%c8_83, %c48_84] : memref<16x96xf32, #tpu.memory_space<vmem>>, vector<8x8xf32>
    %c8_85 = arith.constant 8 : index
    %c80_86 = arith.constant 80 : index
    %143 = vector.load %arg13[%c8_85, %c80_86] : memref<16x96xf32, #tpu.memory_space<vmem>>, vector<8x8xf32>
    %144 = tpu.transpose %142, [1, 0] : vector<8x8xf32> -> vector<8x8xf32>
    %cst_87 = arith.constant dense<0.000000e+00> : vector<8x8xf32>
    %145 = tpu.matmul %141, %144, %cst_87 {dimension_numbers = #tpu.dot_dimension_numbers<[1], [0], [0], [1], [0, 0, 1, 1], [], []>} : vector<8x8xf32>, vector<8x8xf32>, vector<8x8xf32> -> vector<8x8xf32>
    %cst_88 = arith.constant 0.353553385 : f32
    %146 = vector.broadcast %cst_88 : f32 to vector<8x8xf32>
    %147 = arith.mulf %145, %146 : vector<8x8xf32>
    %cst_89 = arith.constant dense<0xFF800000> : vector<8xf32>
    %148 = vector.multi_reduction <maximumf>, %147, %cst_89 [1] : vector<8x8xf32> to vector<8xf32>
    %149 = vector.shape_cast %148 : vector<8xf32> to vector<8x1xf32>
    %150 = vector.broadcast %149 : vector<8x1xf32> to vector<8x8xf32>
    %151 = arith.subf %147, %150 : vector<8x8xf32>
    %152 = math.exp %151 : vector<8x8xf32>
    %cst_90 = arith.constant dense<0.000000e+00> : vector<8xf32>
    %153 = vector.multi_reduction <add>, %152, %cst_90 [1] : vector<8x8xf32> to vector<8xf32>
    %154 = vector.shape_cast %153 : vector<8xf32> to vector<8x1xf32>
    %155 = tpu.reciprocal %154 {approx = true} : vector<8x1xf32> -> vector<8x1xf32>
    %cst_91 = arith.constant dense<0.000000e+00> : vector<8x8xf32>
    %156 = tpu.matmul %152, %143, %cst_91 {dimension_numbers = #tpu.dot_dimension_numbers<[1], [0], [0], [1], [0, 0, 1, 1], [], []>} : vector<8x8xf32>, vector<8x8xf32>, vector<8x8xf32> -> vector<8x8xf32>
    %157 = vector.broadcast %155 : vector<8x1xf32> to vector<8x8xf32>
    %158 = arith.mulf %156, %157 : vector<8x8xf32>
    %c8_92 = arith.constant 8 : index
    %c16_93 = arith.constant 16 : index
    %159 = vector.load %arg14[%c8_92, %c16_93] : memref<16x32xf32, #tpu.memory_space<vmem>>, vector<8x8xf32>
    tpu.vector_store %arg14[%c8_92, %c16_93], %158 {strides = array<i32>} : memref<16x32xf32, #tpu.memory_space<vmem>>, vector<8x8xf32>,
    %c8_94 = arith.constant 8 : index
    %c24_95 = arith.constant 24 : index
    %160 = vector.load %arg13[%c8_94, %c24_95] : memref<16x96xf32, #tpu.memory_space<vmem>>, vector<8x8xf32>
    %c8_96 = arith.constant 8 : index
    %c56_97 = arith.constant 56 : index
    %161 = vector.load %arg13[%c8_96, %c56_97] : memref<16x96xf32, #tpu.memory_space<vmem>>, vector<8x8xf32>
    %c8_98 = arith.constant 8 : index
    %c88_99 = arith.constant 88 : index
    %162 = vector.load %arg13[%c8_98, %c88_99] : memref<16x96xf32, #tpu.memory_space<vmem>>, vector<8x8xf32>
    %163 = tpu.transpose %161, [1, 0] : vector<8x8xf32> -> vector<8x8xf32>
    %cst_100 = arith.constant dense<0.000000e+00> : vector<8x8xf32>
    %164 = tpu.matmul %160, %163, %cst_100 {dimension_numbers = #tpu.dot_dimension_numbers<[1], [0], [0], [1], [0, 0, 1, 1], [], []>} : vector<8x8xf32>, vector<8x8xf32>, vector<8x8xf32> -> vector<8x8xf32>
    %cst_101 = arith.constant 0.353553385 : f32
    %165 = vector.broadcast %cst_101 : f32 to vector<8x8xf32>
    %166 = arith.mulf %164, %165 : vector<8x8xf32>
    %cst_102 = arith.constant dense<0xFF800000> : vector<8xf32>
    %167 = vector.multi_reduction <maximumf>, %166, %cst_102 [1] : vector<8x8xf32> to vector<8xf32>
    %168 = vector.shape_cast %167 : vector<8xf32> to vector<8x1xf32>
    %169 = vector.broadcast %168 : vector<8x1xf32> to vector<8x8xf32>
    %170 = arith.subf %166, %169 : vector<8x8xf32>
    %171 = math.exp %170 : vector<8x8xf32>
    %cst_103 = arith.constant dense<0.000000e+00> : vector<8xf32>
    %172 = vector.multi_reduction <add>, %171, %cst_103 [1] : vector<8x8xf32> to vector<8xf32>
    %173 = vector.shape_cast %172 : vector<8xf32> to vector<8x1xf32>
    %174 = tpu.reciprocal %173 {approx = true} : vector<8x1xf32> -> vector<8x1xf32>
    %cst_104 = arith.constant dense<0.000000e+00> : vector<8x8xf32>
    %175 = tpu.matmul %171, %162, %cst_104 {dimension_numbers = #tpu.dot_dimension_numbers<[1], [0], [0], [1], [0, 0, 1, 1], [], []>} : vector<8x8xf32>, vector<8x8xf32>, vector<8x8xf32> -> vector<8x8xf32>
    %176 = vector.broadcast %174 : vector<8x1xf32> to vector<8x8xf32>
    %177 = arith.mulf %175, %176 : vector<8x8xf32>
    %c8_105 = arith.constant 8 : index
    %c24_106 = arith.constant 24 : index
    %178 = vector.load %arg14[%c8_105, %c24_106] : memref<16x32xf32, #tpu.memory_space<vmem>>, vector<8x8xf32>
    tpu.vector_store %arg14[%c8_105, %c24_106], %177 {strides = array<i32>} : memref<16x32xf32, #tpu.memory_space<vmem>>, vector<8x8xf32>,
    %c0_107 = arith.constant 0 : index
    %c0_108 = arith.constant 0 : index
    %179 = vector.load %arg14[%c0_107, %c0_108] : memref<16x32xf32, #tpu.memory_space<vmem>>, vector<16x32xf32>
    %180 = arith.truncf %179 : vector<16x32xf32> to vector<16x32xbf16>
    %c0_109 = arith.constant 0 : index
    %c0_110 = arith.constant 0 : index
    %181 = vector.load %arg4[%c0_109, %c0_110] : memref<32x32xbf16, #tpu.memory_space<vmem>>, vector<32x32xbf16>
    %cst_111 = arith.constant dense<0.000000e+00> : vector<16x32xf32>
    %182 = tpu.matmul %180, %181, %cst_111 {dimension_numbers = #tpu.dot_dimension_numbers<[1], [0], [0], [1], [0, 0, 1, 1], [], []>} : vector<16x32xbf16>, vector<32x32xbf16>, vector<16x32xf32> -> vector<16x32xf32>
    %c0_112 = arith.constant 0 : index
    %c0_113 = arith.constant 0 : index
    %183 = vector.load %arg5[%c0_112, %c0_113] : memref<1x32xf32, #tpu.memory_space<vmem>>, vector<1x32xf32>
    %184 = vector.broadcast %183 : vector<1x32xf32> to vector<16x32xf32>
    %185 = arith.addf %182, %184 : vector<16x32xf32>
    %186 = arith.addf %0, %185 : vector<16x32xf32>
    %cst_114 = arith.constant dense<0.000000e+00> : vector<16xf32>
    %187 = vector.multi_reduction <add>, %186, %cst_114 [1] : vector<16x32xf32> to vector<16xf32>
    %188 = vector.shape_cast %187 : vector<16xf32> to vector<16x1xf32>
    %cst_115 = arith.constant 3.200000e+01 : f32
    %189 = vector.broadcast %cst_115 : f32 to vector<16x1xf32>
    %190 = arith.divf %188, %189 : vector<16x1xf32>
    %191 = vector.broadcast %190 : vector<16x1xf32> to vector<16x32xf32>
    %192 = arith.subf %186, %191 : vector<16x32xf32>
    %193 = arith.mulf %192, %192 : vector<16x32xf32>
    %cst_116 = arith.constant dense<0.000000e+00> : vector<16xf32>
    %194 = vector.multi_reduction <add>, %193, %cst_116 [1] : vector<16x32xf32> to vector<16xf32>
    %195 = vector.shape_cast %194 : vector<16xf32> to vector<16x1xf32>
    %cst_117 = arith.constant 3.200000e+01 : f32
    %196 = vector.broadcast %cst_117 : f32 to vector<16x1xf32>
    %197 = arith.divf %195, %196 : vector<16x1xf32>
    %cst_118 = arith.constant 9.99999974E-6 : f32
    %198 = vector.broadcast %cst_118 : f32 to vector<16x1xf32>
    %199 = arith.addf %197, %198 : vector<16x1xf32>
    %200 = math.rsqrt %199 : vector<16x1xf32>
    %201 = vector.broadcast %200 : vector<16x1xf32> to vector<16x32xf32>
    %202 = arith.mulf %192, %201 : vector<16x32xf32>
    %c0_119 = arith.constant 0 : index
    %c0_120 = arith.constant 0 : index
    %203 = vector.load %arg6[%c0_119, %c0_120] : memref<1x32xf32, #tpu.memory_space<vmem>>, vector<1x32xf32>
    %204 = vector.broadcast %203 : vector<1x32xf32> to vector<16x32xf32>
    %205 = arith.mulf %202, %204 : vector<16x32xf32>
    %c0_121 = arith.constant 0 : index
    %c0_122 = arith.constant 0 : index
    %206 = vector.load %arg7[%c0_121, %c0_122] : memref<1x32xf32, #tpu.memory_space<vmem>>, vector<1x32xf32>
    %207 = vector.broadcast %206 : vector<1x32xf32> to vector<16x32xf32>
    %208 = arith.addf %205, %207 : vector<16x32xf32>
    %209 = arith.truncf %208 : vector<16x32xf32> to vector<16x32xbf16>
    %c0_123 = arith.constant 0 : index
    %c0_124 = arith.constant 0 : index
    %210 = vector.load %arg8[%c0_123, %c0_124] : memref<32x128xbf16, #tpu.memory_space<vmem>>, vector<32x128xbf16>
    %cst_125 = arith.constant dense<0.000000e+00> : vector<16x128xf32>
    %211 = tpu.matmul %209, %210, %cst_125 {dimension_numbers = #tpu.dot_dimension_numbers<[1], [0], [0], [1], [0, 0, 1, 1], [], []>} : vector<16x32xbf16>, vector<32x128xbf16>, vector<16x128xf32> -> vector<16x128xf32>
    %c0_126 = arith.constant 0 : index
    %c0_127 = arith.constant 0 : index
    %212 = vector.load %arg9[%c0_126, %c0_127] : memref<1x128xf32, #tpu.memory_space<vmem>>, vector<1x128xf32>
    %213 = vector.broadcast %212 : vector<1x128xf32> to vector<16x128xf32>
    %214 = arith.addf %211, %213 : vector<16x128xf32>
    %cst_128 = arith.constant 5.000000e-01 : f32
    %215 = vector.broadcast %cst_128 : f32 to vector<16x128xf32>
    %216 = arith.mulf %215, %214 : vector<16x128xf32>
    %cst_129 = arith.constant 0.707106769 : f32
    %217 = vector.broadcast %cst_129 : f32 to vector<16x128xf32>
    %218 = arith.mulf %214, %217 : vector<16x128xf32>
    %219 = math.erf %218 : vector<16x128xf32>
    %cst_130 = arith.constant 1.000000e+00 : f32
    %220 = vector.broadcast %cst_130 : f32 to vector<16x128xf32>
    %221 = arith.addf %220, %219 : vector<16x128xf32>
    %222 = arith.mulf %216, %221 : vector<16x128xf32>
    %223 = arith.truncf %222 : vector<16x128xf32> to vector<16x128xbf16>
    %c0_131 = arith.constant 0 : index
    %c0_132 = arith.constant 0 : index
    %224 = vector.load %arg10[%c0_131, %c0_132] : memref<128x32xbf16, #tpu.memory_space<vmem>>, vector<128x32xbf16>
    %cst_133 = arith.constant dense<0.000000e+00> : vector<16x32xf32>
    %225 = tpu.matmul %223, %224, %cst_133 {dimension_numbers = #tpu.dot_dimension_numbers<[1], [0], [0], [1], [0, 0, 1, 1], [], []>} : vector<16x128xbf16>, vector<128x32xbf16>, vector<16x32xf32> -> vector<16x32xf32>
    %c0_134 = arith.constant 0 : index
    %c0_135 = arith.constant 0 : index
    %226 = vector.load %arg11[%c0_134, %c0_135] : memref<1x32xf32, #tpu.memory_space<vmem>>, vector<1x32xf32>
    %227 = vector.broadcast %226 : vector<1x32xf32> to vector<16x32xf32>
    %228 = arith.addf %225, %227 : vector<16x32xf32>
    %229 = arith.addf %186, %228 : vector<16x32xf32>
    %c0_136 = arith.constant 0 : index
    %c0_137 = arith.constant 0 : index
    %230 = vector.load %arg12[%c0_136, %c0_137] : memref<16x32xf32, #tpu.memory_space<vmem>>, vector<16x32xf32>
    tpu.vector_store %arg12[%c0_136, %c0_137], %229 {strides = array<i32>} : memref<16x32xf32, #tpu.memory_space<vmem>>, vector<16x32xf32>,
    return
  }
}

</mosaic_0001>

<llo_original>
// kernel: block_forward_pallas.1
$region0: #{block_forward_pallas.1}
  #allocation0 [shape = 'u32[]', space=smem, size = 0x4, offset = 0x4, fixed_abs, tag = 'smem constant byte address 0x4 - core index']
  #allocation1 [shape = 'u32[144,128]{1,0:T(1,128)}', space=vmem, size = 0x12000, scoped, tag = 'internal scratch']
  #allocation2 [shape = 'f32[16,96]{1,0:T(8,128)}', space=vmem, size = 0x2000, scoped, tag = 'scratch operand']
  #allocation3 [shape = 'f32[16,32]{1,0:T(8,128)}', space=vmem, size = 0x2000, scoped, tag = 'scratch operand']
  %s0 = inlined_call_operand.vmem [shape: f32[16,32], index: 0, kind: input, shape index: {}]
  %s1 = inlined_call_operand.vmem [shape: f32[1,32], index: 1, kind: input, shape index: {}]
  %s2 = inlined_call_operand.vmem [shape: f32[1,32], index: 2, kind: input, shape index: {}]
  %s3 = inlined_call_operand.vmem [shape: bf16[32,96], index: 3, kind: input, shape index: {}]
  %s4 = inlined_call_operand.vmem [shape: bf16[32,32], index: 4, kind: input, shape index: {}]
  %s5 = inlined_call_operand.vmem [shape: f32[1,32], index: 5, kind: input, shape index: {}]
  %s6 = inlined_call_operand.vmem [shape: f32[1,32], index: 6, kind: input, shape index: {}]
  %s7 = inlined_call_operand.vmem [shape: f32[1,32], index: 7, kind: input, shape index: {}]
  %s8 = inlined_call_operand.vmem [shape: bf16[32,128], index: 8, kind: input, shape index: {}]
  %s9 = inlined_call_operand.vmem [shape: f32[1,128], index: 9, kind: input, shape index: {}]
  %s10 = inlined_call_operand.vmem [shape: bf16[128,32], index: 10, kind: input, shape index: {}]
  %s11 = inlined_call_operand.vmem [shape: f32[1,32], index: 11, kind: input, shape index: {}]
  %s12 = inlined_call_operand.hbm [shape: f32[16,32], index: 12, kind: output, shape index: {}]
  %s13 = sld [smem:[#allocation0]]
  $region58: #{block_forward_pallas.1} parent=0
    _
  %s15 = ssub.s32 1, %s13
  %s16 = scalar_select 0, %s15, %s13
  $region1: #{block_forward_pallas.1} parent=0
    #allocation4 [shape = 'u8[8192]{0}', space=vmem, size = 0x2000, scoped, tag = 'output window, operand 0, single buffered']
    #allocation5 [shape = 's32[1]{0}', space=sflag, size = 0x4, scoped, tag = 'scoped memory for block_forward_pallas.1']
    %17 = vsyncpa [#allocation5], 0
    // Predicated region
    $region2: #{block_forward_pallas.1} parent=1 // pred_check
      _
    $region3: #{block_forward_pallas.1} parent=1 // pred_check_branch
      %19 = sbr.rel (0) target = $region5
    $region4: #{block_forward_pallas.1} parent=1 // pred_region
      _
    $region5: #{block_forward_pallas.1} parent=1 // pred_fallthru
      _
    // Predicated region
    $region6: #{block_forward_pallas.1} parent=1 // pred_check
      _
    $region7: #{block_forward_pallas.1} parent=1 // pred_check_branch
      %21 = sbr.rel (0) target = $region9
    $region8: #{block_forward_pallas.1} parent=1 // pred_region
      _
    $region9: #{block_forward_pallas.1} parent=1 // pred_fallthru
      _
    // Predicated region
    $region10: #{block_forward_pallas.1} parent=1 // pred_check
      _
    $region11: #{block_forward_pallas.1} parent=1 // pred_check_branch
      %23 = sbr.rel (0) target = $region13
    $region12: #{block_forward_pallas.1} parent=1 // pred_region
      _
    $region13: #{block_forward_pallas.1} parent=1 // pred_fallthru
      _
    // Predicated region
    $region14: #{block_forward_pallas.1} parent=1 // pred_check
      _
    $region15: #{block_forward_pallas.1} parent=1 // pred_check_branch
      %25 = sbr.rel (0) target = $region17
    $region16: #{block_forward_pallas.1} parent=1 // pred_region
      _
    $region17: #{block_forward_pallas.1} parent=1 // pred_fallthru
      _
    // Predicated region
    $region18: #{block_forward_pallas.1} parent=1 // pred_check
      _
    $region19: #{block_forward_pallas.1} parent=1 // pred_check_branch
      %27 = sbr.rel (0) target = $region21
    $region20: #{block_forward_pallas.1} parent=1 // pred_region
      _
    $region21: #{block_forward_pallas.1} parent=1 // pred_fallthru
      _
    // Predicated region
    $region22: #{block_forward_pallas.1} parent=1 // pred_check
      _
    $region23: #{block_forward_pallas.1} parent=1 // pred_check_branch
      %29 = sbr.rel (0) target = $region25
    $region24: #{block_forward_pallas.1} parent=1 // pred_region
      _
    $region25: #{block_forward_pallas.1} parent=1 // pred_fallthru
      _
    // Predicated region
    $region26: #{block_forward_pallas.1} parent=1 // pred_check
      _
    $region27: #{block_forward_pallas.1} parent=1 // pred_check_branch
      %31 = sbr.rel (0) target = $region29
    $region28: #{block_forward_pallas.1} parent=1 // pred_region
      _
    $region29: #{block_forward_pallas.1} parent=1 // pred_fallthru
      _
    // Predicated region
    $region30: #{block_forward_pallas.1} parent=1 // pred_check
      _
    $region31: #{block_forward_pallas.1} parent=1 // pred_check_branch
      %33 = sbr.rel (0) target = $region33
    $region32: #{block_forward_pallas.1} parent=1 // pred_region
      _
    $region33: #{block_forward_pallas.1} parent=1 // pred_fallthru
      _
    // Predicated region
    $region34: #{block_forward_pallas.1} parent=1 // pred_check
      _
    $region35: #{block_forward_pallas.1} parent=1 // pred_check_branch
      %35 = sbr.rel (0) target = $region37
    $region36: #{block_forward_pallas.1} parent=1 // pred_region
      _
    $region37: #{block_forward_pallas.1} parent=1 // pred_fallthru
      _
    // Predicated region
    $region38: #{block_forward_pallas.1} parent=1 // pred_check
      _
    $region39: #{block_forward_pallas.1} parent=1 // pred_check_branch
      %37 = sbr.rel (0) target = $region41
    $region40: #{block_forward_pallas.1} parent=1 // pred_region
      _
    $region41: #{block_forward_pallas.1} parent=1 // pred_fallthru
      _
    // Predicated region
    $region42: #{block_forward_pallas.1} parent=1 // pred_check
      _
    $region43: #{block_forward_pallas.1} parent=1 // pred_check_branch
      %39 = sbr.rel (0) target = $region45
    $region44: #{block_forward_pallas.1} parent=1 // pred_region
      _
    $region45: #{block_forward_pallas.1} parent=1 // pred_fallthru
      _
    // Predicated region
    $region46: #{block_forward_pallas.1} parent=1 // pred_check
      _
    $region47: #{block_forward_pallas.1} parent=1 // pred_check_branch
      %41 = sbr.rel (0) target = $region49
    $region48: #{block_forward_pallas.1} parent=1 // pred_region
      _
    $region49: #{block_forward_pallas.1} parent=1 // pred_fallthru
      _
    %v43 = vld [vmem:[%s0] sm:$0xff]
    %v44 = vld [vmem:[%s0 + $0x8] sm:$0xff]
    %vm45 = vcmask 261120
    %v46 = vsel %vm45, %v43, 0.0
    %47 = vadd.xlane.f32.xlu0 %v46
    %v48 = vpop.xlane.xlu0 %47
    %v49 = vsel %vm45, %v44, 0.0
    %50 = vadd.xlane.f32.xlu0 %v49
    %v51 = vpop.xlane.xlu0 %50
    %v52 = vrcp.pop 32.0
    %v53 = vmul.f32 %v48, %v52
    %v54 = vmul.f32 %v51, %v52
    %v55 = vsub.f32 %v43, %v53
    %v56 = vsub.f32 %v44, %v54
    %v57 = vmul.f32 %v55, %v55
    %v58 = vmul.f32 %v56, %v56
    %v59 = vsel %vm45, %v57, 0.0
    %60 = vadd.xlane.f32.xlu0 %v59
    %v61 = vpop.xlane.xlu0 %60
    %v62 = vsel %vm45, %v58, 0.0
    %63 = vadd.xlane.f32.xlu0 %v62
    %v64 = vpop.xlane.xlu0 %63
    %v65 = vmul.f32 %v61, %v52
    %v66 = vmul.f32 %v64, %v52
    %v67 = vadd.f32 %v65, 1e-05
    %v68 = vadd.f32 %v66, 1e-05
    %v69 = vrsqrt.pop %v67
    %v70 = vrsqrt.pop %v68
    %v71 = vmul.f32 %v55, %v69
    %v72 = vmul.f32 %v56, %v70
    %v73 = vld [vmem:[%s1] sm:$0x1]
    %v75 = vlaneseq
    %v76 = vshrl.u32 %v75, 7
    %v77 = vsub.s32 0, %v76
    %v78 = vrot.slane %v73, %v77
    %v80 = vmul.f32 %v71, %v78
    %v81 = vmul.f32 %v72, %v78
    %v82 = vld [vmem:[%s2] sm:$0x1]
    %v84 = vlaneseq
    %v85 = vshrl.u32 %v84, 7
    %v86 = vsub.s32 0, %v85
    %v87 = vrot.slane %v82, %v86
    %v89 = vadd.f32 %v80, %v87
    %v90 = vadd.f32 %v81, %v87
    %v91 = vpack.c.bf16 %v90, %v89
    %v92 = vld [vmem:[%s3] sm:$0xf]
    %v93 = vld [vmem:[%s3 + $0x4] sm:$0xf]
    %v94 = vld [vmem:[%s3 + $0x8] sm:$0xf]
    %v95 = vld [vmem:[%s3 + $0xc] sm:$0xf]
    %v100 = vunpack.c.l.b16 %v92
    %v101 = vunpack.c.l.b16 %v93
    %v102 = vunpack.c.l.b16 %v94
    %v103 = vunpack.c.l.b16 %v95
    %v104 = vpack.c.b16 %v101, %v100
    %v105 = vpack.c.b16 %v103, %v102
    %v109 = vsel %vm45, %v91, 0
    %111 = vmatprep.subr.bf16.mxu0 0
    %112 = vmatpush1.bf16.msra.mxu0 %v104
    %113 = vmatprep.subr.bf16.mxu0 0
    %114 = vmatpush1.bf16.msra.mxu0 %v105
    %115 = vmatprep.subr.bf16.mxu0 0
    %116 = vmatpush1.bf16.msra.mxu0 0
    %117 = vmatprep.subr.bf16.mxu0 0
    %118 = vmatpush1.bf16.msra.mxu0 0
    %119 = vmatprep.subr.bf16.mxu0 0
    %120 = vmatpush1.bf16.msra.mxu0 0
    %121 = vmatprep.subr.bf16.mxu0 0
    %122 = vmatpush1.bf16.msra.mxu0 0
    %123 = vmatprep.subr.bf16.mxu0 0
    %124 = vmatpush1.bf16.msra.mxu0 0
    %125 = vmatprep.subr.bf16.mxu0 0
    %126 = vmatpush1.bf16.msra.mxu0 0
    %127 = vmatprep.subr.bf16.mxu0 0
    %128 = vmatpush1.bf16.msra.mxu0 0
    %129 = vmatprep.subr.bf16.mxu0 0
    %130 = vmatpush1.bf16.msra.mxu0 0
    %131 = vmatprep.subr.bf16.mxu0 0
    %132 = vmatpush1.bf16.msra.mxu0 0
    %133 = vmatprep.subr.bf16.mxu0 0
    %134 = vmatpush1.bf16.msra.mxu0 0
    %135 = vmatprep.subr.bf16.mxu0 0
    %136 = vmatpush1.bf16.msra.mxu0 0
    %137 = vmatprep.subr.bf16.mxu0 0
    %138 = vmatpush1.bf16.msra.mxu0 0
    %139 = vmatprep.subr.bf16.mxu0 0
    %140 = vmatpush1.bf16.msra.mxu0 0
    %141 = vmatprep.subr.bf16.mxu0 0
    %142 = vmatpush1.bf16.msra.mxu0 0
    %143 = vmatprep.mubr.bf16.mxu0 0
    %144 = vmatmul.mubr.bf16.gmra.mrb[0].mxu0 %v109
    %v145 = vpop.f32.mrb[0].mxu0
    %v146 = vadd.f32 0.0, %v145
    %v147 = vpop.f32.mrb[0].mxu0
    %v148 = vpop.f32.mrb[0].mxu0
    %v149 = vadd.f32 0.0, %v148
    %v150 = vpop.f32.mrb[0].mxu0
    %151 = vdwg.mxu0
    %vm152 = vcmask 785408
    %153 = vst.msk [vmem:[#allocation2] sm:$0xff] %vm152, %v146
    %154 = vst.msk [vmem:[#allocation2 + $0x8] sm:$0xff] %vm152, %v149
    %v155 = vld [vmem:[#allocation2] sm:$0xff]
    %157 = vrot.lane.b32.xlu0 %v155, 96
    %v158 = vpop.permute.xlu0 %157
    %vm159 = vcmask 64512
    %v160 = vsel %vm159, %v155, 0
    %v162 = vsel %vm159, %v158, 0
    %164 = vmatprep.subr.mxu0 0.0
    %165 = vmatpush1.xpose.msra.mxu0 %v162
    %166 = vmatprep.subr.mxu0 0.0
    %167 = vmatpush1.xpose.msra.mxu0 0.0
    %168 = vmatprep.subr.mxu0 0.0
    %169 = vmatpush1.xpose.msra.mxu0 0.0
    %170 = vmatprep.subr.mxu0 0.0
    %171 = vmatpush1.xpose.msra.mxu0 0.0
    %172 = vmatprep.subr.mxu0 0.0
    %173 = vmatpush1.xpose.msra.mxu0 0.0
    %174 = vmatprep.subr.mxu0 0.0
    %175 = vmatpush1.xpose.msra.mxu0 0.0
    %176 = vmatprep.subr.mxu0 0.0
    %177 = vmatpush1.xpose.msra.mxu0 0.0
    %178 = vmatprep.subr.mxu0 0.0
    %179 = vmatpush1.xpose.msra.mxu0 0.0
    %180 = vmatprep.subr.mxu0 0.0
    %181 = vmatpush1.xpose.msra.mxu0 0.0
    %182 = vmatprep.subr.mxu0 0.0
    %183 = vmatpush1.xpose.msra.mxu0 0.0
    %184 = vmatprep.subr.mxu0 0.0
    %185 = vmatpush1.xpose.msra.mxu0 0.0
    %186 = vmatprep.subr.mxu0 0.0
    %187 = vmatpush1.xpose.msra.mxu0 0.0
    %188 = vmatprep.subr.mxu0 0.0
    %189 = vmatpush1.xpose.msra.mxu0 0.0
    %190 = vmatprep.subr.mxu0 0.0
    %191 = vmatpush1.xpose.msra.mxu0 0.0
    %192 = vmatprep.subr.mxu0 0.0
    %193 = vmatpush1.xpose.msra.mxu0 0.0
    %194 = vmatprep.subr.mxu0 0.0
    %195 = vmatpush1.xpose.msra.mxu0 0.0
    %196 = vmatprep.subr.mxu0 0.0
    %197 = vmatpush1.xpose.msra.mxu0 0.0
    %198 = vmatprep.subr.mxu0 0.0
    %199 = vmatpush1.xpose.msra.mxu0 0.0
    %200 = vmatprep.subr.mxu0 0.0
    %201 = vmatpush1.xpose.msra.mxu0 0.0
    %202 = vmatprep.subr.mxu0 0.0
    %203 = vmatpush1.xpose.msra.mxu0 0.0
    %204 = vmatprep.subr.mxu0 0.0
    %205 = vmatpush1.xpose.msra.mxu0 0.0
    %206 = vmatprep.subr.mxu0 0.0
    %207 = vmatpush1.xpose.msra.mxu0 0.0
    %208 = vmatprep.subr.mxu0 0.0
    %209 = vmatpush1.xpose.msra.mxu0 0.0
    %210 = vmatprep.subr.mxu0 0.0
    %211 = vmatpush1.xpose.msra.mxu0 0.0
    %212 = vmatprep.subr.mxu0 0.0
    %213 = vmatpush1.xpose.msra.mxu0 0.0
    %214 = vmatprep.subr.mxu0 0.0
    %215 = vmatpush1.xpose.msra.mxu0 0.0
    %216 = vmatprep.subr.mxu0 0.0
    %217 = vmatpush1.xpose.msra.mxu0 0.0
    %218 = vmatprep.subr.mxu0 0.0
    %219 = vmatpush1.xpose.msra.mxu0 0.0
    %220 = vmatprep.subr.mxu0 0.0
    %221 = vmatpush1.xpose.msra.mxu0 0.0
    %222 = vmatprep.subr.mxu0 0.0
    %223 = vmatpush1.xpose.msra.mxu0 0.0
    %224 = vmatprep.subr.mxu0 0.0
    %225 = vmatpush1.xpose.msra.mxu0 0.0
    %226 = vmatprep.subr.mxu0 0.0
    %227 = vmatpush1.xpose.msra.mxu0 0.0
    %228 = vmatprep.mubr.f32.mxu0 0.0
    %229 = vmatmul.mubr.f32.gmra.mrb[0].mxu0 %v160
    %v230 = vpop.f32.mrb[0].mxu0
    %v231 = vadd.f32 0.0, %v230
    %v232 = vpop.f32.mrb[0].mxu0
    %233 = vdwg.mxu0
    %v234 = vmul.f32 %v231, 0.35355338
    %v235 = vsel %vm159, %v234, -inf
    %236 = vmax.xlane.f32.xlu0 %v235
    %v237 = vpop.xlane.xlu0 %236
    %v238 = vsub.f32 %v234, %v237
    %v239 = vmul.f32 %v238, 1.442695
    %v240 = vpow.pop %v239
    %v241 = vsel %vm159, %v240, 0.0
    %242 = vadd.xlane.f32.xlu0 %v241
    %v243 = vpop.xlane.xlu0 %242
    %v244 = vrcp.pop %v243
    %245 = vrot.lane.b32.xlu0 %v155, 64
    %v246 = vpop.permute.xlu0 %245
    %v249 = vsel %vm159, %v240, 0
    %251 = vmatprep.subr.mxu0 0.0
    %252 = vmatpush1.msra.mxu0 %v246
    %253 = vmatprep.subr.mxu0 0.0
    %254 = vmatpush1.msra.mxu0 0.0
    %255 = vmatprep.subr.mxu0 0.0
    %256 = vmatpush1.msra.mxu0 0.0
    %257 = vmatprep.subr.mxu0 0.0
    %258 = vmatpush1.msra.mxu0 0.0
    %259 = vmatprep.subr.mxu0 0.0
    %260 = vmatpush1.msra.mxu0 0.0
    %261 = vmatprep.subr.mxu0 0.0
    %262 = vmatpush1.msra.mxu0 0.0
    %263 = vmatprep.subr.mxu0 0.0
    %264 = vmatpush1.msra.mxu0 0.0
    %265 = vmatprep.subr.mxu0 0.0
    %266 = vmatpush1.msra.mxu0 0.0
    %267 = vmatprep.subr.mxu0 0.0
    %268 = vmatpush1.msra.mxu0 0.0
    %269 = vmatprep.subr.mxu0 0.0
    %270 = vmatpush1.msra.mxu0 0.0
    %271 = vmatprep.subr.mxu0 0.0
    %272 = vmatpush1.msra.mxu0 0.0
    %273 = vmatprep.subr.mxu0 0.0
    %274 = vmatpush1.msra.mxu0 0.0
    %275 = vmatprep.subr.mxu0 0.0
    %276 = vmatpush1.msra.mxu0 0.0
    %277 = vmatprep.subr.mxu0 0.0
    %278 = vmatpush1.msra.mxu0 0.0
    %279 = vmatprep.subr.mxu0 0.0
    %280 = vmatpush1.msra.mxu0 0.0
    %281 = vmatprep.subr.mxu0 0.0
    %282 = vmatpush1.msra.mxu0 0.0
    %283 = vmatprep.subr.mxu0 0.0
    %284 = vmatpush1.msra.mxu0 0.0
    %285 = vmatprep.subr.mxu0 0.0
    %286 = vmatpush1.msra.mxu0 0.0
    %287 = vmatprep.subr.mxu0 0.0
    %288 = vmatpush1.msra.mxu0 0.0
    %289 = vmatprep.subr.mxu0 0.0
    %290 = vmatpush1.msra.mxu0 0.0
    %291 = vmatprep.subr.mxu0 0.0
    %292 = vmatpush1.msra.mxu0 0.0
    %293 = vmatprep.subr.mxu0 0.0
    %294 = vmatpush1.msra.mxu0 0.0
    %295 = vmatprep.subr.mxu0 0.0
    %296 = vmatpush1.msra.mxu0 0.0
    %297 = vmatprep.subr.mxu0 0.0
    %298 = vmatpush1.msra.mxu0 0.0
    %299 = vmatprep.subr.mxu0 0.0
    %300 = vmatpush1.msra.mxu0 0.0
    %301 = vmatprep.subr.mxu0 0.0
    %302 = vmatpush1.msra.mxu0 0.0
    %303 = vmatprep.subr.mxu0 0.0
    %304 = vmatpush1.msra.mxu0 0.0
    %305 = vmatprep.subr.mxu0 0.0
    %306 = vmatpush1.msra.mxu0 0.0
    %307 = vmatprep.subr.mxu0 0.0
    %308 = vmatpush1.msra.mxu0 0.0
    %309 = vmatprep.subr.mxu0 0.0
    %310 = vmatpush1.msra.mxu0 0.0
    %311 = vmatprep.subr.mxu0 0.0
    %312 = vmatpush1.msra.mxu0 0.0
    %313 = vmatprep.subr.mxu0 0.0
    %314 = vmatpush1.msra.mxu0 0.0
    %315 = vmatprep.mubr.f32.mxu0 0.0
    %316 = vmatmul.mubr.f32.gmra.mrb[0].mxu0 %v249
    %v317 = vpop.f32.mrb[0].mxu0
    %v318 = vadd.f32 0.0, %v317
    %v319 = vpop.f32.mrb[0].mxu0
    %320 = vdwg.mxu0
    %v321 = vmul.f32 %v318, %v244
    %322 = vst.msk [vmem:[#allocation3] sm:$0xff] %vm159, %v321
    %v323 = vld [vmem:[#allocation2] sm:$0xff]
    %325 = vrot.lane.b32.xlu0 %v323, 120
    %v326 = vpop.permute.xlu0 %325
    %327 = vrot.lane.b32.xlu0 %v323, 88
    %v328 = vpop.permute.xlu0 %327
    %v329 = vsel %vm159, %v326, 0
    %v331 = vsel %vm159, %v328, 0
    %333 = vmatprep.subr.mxu0 0.0
    %334 = vmatpush1.xpose.msra.mxu0 %v331
    %335 = vmatprep.subr.mxu0 0.0
    %336 = vmatpush1.xpose.msra.mxu0 0.0
    %337 = vmatprep.subr.mxu0 0.0
    %338 = vmatpush1.xpose.msra.mxu0 0.0
    %339 = vmatprep.subr.mxu0 0.0
    %340 = vmatpush1.xpose.msra.mxu0 0.0
    %341 = vmatprep.subr.mxu0 0.0
    %342 = vmatpush1.xpose.msra.mxu0 0.0
    %343 = vmatprep.subr.mxu0 0.0
    %344 = vmatpush1.xpose.msra.mxu0 0.0
    %345 = vmatprep.subr.mxu0 0.0
    %346 = vmatpush1.xpose.msra.mxu0 0.0
    %347 = vmatprep.subr.mxu0 0.0
    %348 = vmatpush1.xpose.msra.mxu0 0.0
    %349 = vmatprep.subr.mxu0 0.0
    %350 = vmatpush1.xpose.msra.mxu0 0.0
    %351 = vmatprep.subr.mxu0 0.0
    %352 = vmatpush1.xpose.msra.mxu0 0.0
    %353 = vmatprep.subr.mxu0 0.0
    %354 = vmatpush1.xpose.msra.mxu0 0.0
    %355 = vmatprep.subr.mxu0 0.0
    %356 = vmatpush1.xpose.msra.mxu0 0.0
    %357 = vmatprep.subr.mxu0 0.0
    %358 = vmatpush1.xpose.msra.mxu0 0.0
    %359 = vmatprep.subr.mxu0 0.0
    %360 = vmatpush1.xpose.msra.mxu0 0.0
    %361 = vmatprep.subr.mxu0 0.0
    %362 = vmatpush1.xpose.msra.mxu0 0.0
    %363 = vmatprep.subr.mxu0 0.0
    %364 = vmatpush1.xpose.msra.mxu0 0.0
    %365 = vmatprep.subr.mxu0 0.0
    %366 = vmatpush1.xpose.msra.mxu0 0.0
    %367 = vmatprep.subr.mxu0 0.0
    %368 = vmatpush1.xpose.msra.mxu0 0.0
    %369 = vmatprep.subr.mxu0 0.0
    %370 = vmatpush1.xpose.msra.mxu0 0.0
    %371 = vmatprep.subr.mxu0 0.0
    %372 = vmatpush1.xpose.msra.mxu0 0.0
    %373 = vmatprep.subr.mxu0 0.0
    %374 = vmatpush1.xpose.msra.mxu0 0.0
    %375 = vmatprep.subr.mxu0 0.0
    %376 = vmatpush1.xpose.msra.mxu0 0.0
    %377 = vmatprep.subr.mxu0 0.0
    %378 = vmatpush1.xpose.msra.mxu0 0.0
    %379 = vmatprep.subr.mxu0 0.0
    %380 = vmatpush1.xpose.msra.mxu0 0.0
    %381 = vmatprep.subr.mxu0 0.0
    %382 = vmatpush1.xpose.msra.mxu0 0.0
    %383 = vmatprep.subr.mxu0 0.0
    %384 = vmatpush1.xpose.msra.mxu0 0.0
    %385 = vmatprep.subr.mxu0 0.0
    %386 = vmatpush1.xpose.msra.mxu0 0.0
    %387 = vmatprep.subr.mxu0 0.0
    %388 = vmatpush1.xpose.msra.mxu0 0.0
    %389 = vmatprep.subr.mxu0 0.0
    %390 = vmatpush1.xpose.msra.mxu0 0.0
    %391 = vmatprep.subr.mxu0 0.0
    %392 = vmatpush1.xpose.msra.mxu0 0.0
    %393 = vmatprep.subr.mxu0 0.0
    %394 = vmatpush1.xpose.msra.mxu0 0.0
    %395 = vmatprep.subr.mxu0 0.0
    %396 = vmatpush1.xpose.msra.mxu0 0.0
    %397 = vmatprep.mubr.f32.mxu0 0.0
    %398 = vmatmul.mubr.f32.gmra.mrb[0].mxu0 %v329
    %v399 = vpop.f32.mrb[0].mxu0
    %v400 = vadd.f32 0.0, %v399
    %v401 = vpop.f32.mrb[0].mxu0
    %402 = vdwg.mxu0
    %v403 = vmul.f32 %v400, 0.35355338
    %v404 = vsel %vm159, %v403, -inf
    %405 = vmax.xlane.f32.xlu0 %v404
    %v406 = vpop.xlane.xlu0 %405
    %v407 = vsub.f32 %v403, %v406
    %v408 = vmul.f32 %v407, 1.442695
    %v409 = vpow.pop %v408
    %v410 = vsel %vm159, %v409, 0.0
    %411 = vadd.xlane.f32.xlu0 %v410
    %v412 = vpop.xlane.xlu0 %411
    %v413 = vrcp.pop %v412
    %414 = vrot.lane.b32.xlu0 %v323, 56
    %v415 = vpop.permute.xlu0 %414
    %v418 = vsel %vm159, %v409, 0
    %420 = vmatprep.subr.mxu0 0.0
    %421 = vmatpush1.msra.mxu0 %v415
    %422 = vmatprep.subr.mxu0 0.0
    %423 = vmatpush1.msra.mxu0 0.0
    %424 = vmatprep.subr.mxu0 0.0
    %425 = vmatpush1.msra.mxu0 0.0
    %426 = vmatprep.subr.mxu0 0.0
    %427 = vmatpush1.msra.mxu0 0.0
    %428 = vmatprep.subr.mxu0 0.0
    %429 = vmatpush1.msra.mxu0 0.0
    %430 = vmatprep.subr.mxu0 0.0
    %431 = vmatpush1.msra.mxu0 0.0
    %432 = vmatprep.subr.mxu0 0.0
    %433 = vmatpush1.msra.mxu0 0.0
    %434 = vmatprep.subr.mxu0 0.0
    %435 = vmatpush1.msra.mxu0 0.0
    %436 = vmatprep.subr.mxu0 0.0
    %437 = vmatpush1.msra.mxu0 0.0
    %438 = vmatprep.subr.mxu0 0.0
    %439 = vmatpush1.msra.mxu0 0.0
    %440 = vmatprep.subr.mxu0 0.0
    %441 = vmatpush1.msra.mxu0 0.0
    %442 = vmatprep.subr.mxu0 0.0
    %443 = vmatpush1.msra.mxu0 0.0
    %444 = vmatprep.subr.mxu0 0.0
    %445 = vmatpush1.msra.mxu0 0.0
    %446 = vmatprep.subr.mxu0 0.0
    %447 = vmatpush1.msra.mxu0 0.0
    %448 = vmatprep.subr.mxu0 0.0
    %449 = vmatpush1.msra.mxu0 0.0
    %450 = vmatprep.subr.mxu0 0.0
    %451 = vmatpush1.msra.mxu0 0.0
    %452 = vmatprep.subr.mxu0 0.0
    %453 = vmatpush1.msra.mxu0 0.0
    %454 = vmatprep.subr.mxu0 0.0
    %455 = vmatpush1.msra.mxu0 0.0
    %456 = vmatprep.subr.mxu0 0.0
    %457 = vmatpush1.msra.mxu0 0.0
    %458 = vmatprep.subr.mxu0 0.0
    %459 = vmatpush1.msra.mxu0 0.0
    %460 = vmatprep.subr.mxu0 0.0
    %461 = vmatpush1.msra.mxu0 0.0
    %462 = vmatprep.subr.mxu0 0.0
    %463 = vmatpush1.msra.mxu0 0.0
    %464 = vmatprep.subr.mxu0 0.0
    %465 = vmatpush1.msra.mxu0 0.0
    %466 = vmatprep.subr.mxu0 0.0
    %467 = vmatpush1.msra.mxu0 0.0
    %468 = vmatprep.subr.mxu0 0.0
    %469 = vmatpush1.msra.mxu0 0.0
    %470 = vmatprep.subr.mxu0 0.0
    %471 = vmatpush1.msra.mxu0 0.0
    %472 = vmatprep.subr.mxu0 0.0
    %473 = vmatpush1.msra.mxu0 0.0
    %474 = vmatprep.subr.mxu0 0.0
    %475 = vmatpush1.msra.mxu0 0.0
    %476 = vmatprep.subr.mxu0 0.0
    %477 = vmatpush1.msra.mxu0 0.0
    %478 = vmatprep.subr.mxu0 0.0
    %479 = vmatpush1.msra.mxu0 0.0
    %480 = vmatprep.subr.mxu0 0.0
    %481 = vmatpush1.msra.mxu0 0.0
    %482 = vmatprep.subr.mxu0 0.0
    %483 = vmatpush1.msra.mxu0 0.0
    %484 = vmatprep.mubr.f32.mxu0 0.0
    %485 = vmatmul.mubr.f32.gmra.mrb[0].mxu0 %v418
    %v486 = vpop.f32.mrb[0].mxu0
    %v487 = vadd.f32 0.0, %v486
    %v488 = vpop.f32.mrb[0].mxu0
    %489 = vdwg.mxu0
    %v490 = vmul.f32 %v487, %v413
    %492 = vrot.lane.b32.xlu0 %v490, 8
    %v493 = vpop.permute.xlu0 %492
    %vm495 = vcmask 130112
    %496 = vst.msk [vmem:[#allocation3] sm:$0xff] %vm495, %v493
    %v497 = vld [vmem:[#allocation2] sm:$0xff]
    %499 = vrot.lane.b32.xlu0 %v497, 112
    %v500 = vpop.permute.xlu0 %499
    %501 = vrot.lane.b32.xlu0 %v497, 80
    %v502 = vpop.permute.xlu0 %501
    %v503 = vsel %vm159, %v500, 0
    %v505 = vsel %vm159, %v502, 0
    %507 = vmatprep.subr.mxu0 0.0
    %508 = vmatpush1.xpose.msra.mxu0 %v505
    %509 = vmatprep.subr.mxu0 0.0
    %510 = vmatpush1.xpose.msra.mxu0 0.0
    %511 = vmatprep.subr.mxu0 0.0
    %512 = vmatpush1.xpose.msra.mxu0 0.0
    %513 = vmatprep.subr.mxu0 0.0
    %514 = vmatpush1.xpose.msra.mxu0 0.0
    %515 = vmatprep.subr.mxu0 0.0
    %516 = vmatpush1.xpose.msra.mxu0 0.0
    %517 = vmatprep.subr.mxu0 0.0
    %518 = vmatpush1.xpose.msra.mxu0 0.0
    %519 = vmatprep.subr.mxu0 0.0
    %520 = vmatpush1.xpose.msra.mxu0 0.0
    %521 = vmatprep.subr.mxu0 0.0
    %522 = vmatpush1.xpose.msra.mxu0 0.0
    %523 = vmatprep.subr.mxu0 0.0
    %524 = vmatpush1.xpose.msra.mxu0 0.0
    %525 = vmatprep.subr.mxu0 0.0
    %526 = vmatpush1.xpose.msra.mxu0 0.0
    %527 = vmatprep.subr.mxu0 0.0
    %528 = vmatpush1.xpose.msra.mxu0 0.0
    %529 = vmatprep.subr.mxu0 0.0
    %530 = vmatpush1.xpose.msra.mxu0 0.0
    %531 = vmatprep.subr.mxu0 0.0
    %532 = vmatpush1.xpose.msra.mxu0 0.0
    %533 = vmatprep.subr.mxu0 0.0
    %534 = vmatpush1.xpose.msra.mxu0 0.0
    %535 = vmatprep.subr.mxu0 0.0
    %536 = vmatpush1.xpose.msra.mxu0 0.0
    %537 = vmatprep.subr.mxu0 0.0
    %538 = vmatpush1.xpose.msra.mxu0 0.0
    %539 = vmatprep.subr.mxu0 0.0
    %540 = vmatpush1.xpose.msra.mxu0 0.0
    %541 = vmatprep.subr.mxu0 0.0
    %542 = vmatpush1.xpose.msra.mxu0 0.0
    %543 = vmatprep.subr.mxu0 0.0
    %544 = vmatpush1.xpose.msra.mxu0 0.0
    %545 = vmatprep.subr.mxu0 0.0
    %546 = vmatpush1.xpose.msra.mxu0 0.0
    %547 = vmatprep.subr.mxu0 0.0
    %548 = vmatpush1.xpose.msra.mxu0 0.0
    %549 = vmatprep.subr.mxu0 0.0
    %550 = vmatpush1.xpose.msra.mxu0 0.0
    %551 = vmatprep.subr.mxu0 0.0
    %552 = vmatpush1.xpose.msra.mxu0 0.0
    %553 = vmatprep.subr.mxu0 0.0
    %554 = vmatpush1.xpose.msra.mxu0 0.0
    %555 = vmatprep.subr.mxu0 0.0
    %556 = vmatpush1.xpose.msra.mxu0 0.0
    %557 = vmatprep.subr.mxu0 0.0
    %558 = vmatpush1.xpose.msra.mxu0 0.0
    %559 = vmatprep.subr.mxu0 0.0
    %560 = vmatpush1.xpose.msra.mxu0 0.0
    %561 = vmatprep.subr.mxu0 0.0
    %562 = vmatpush1.xpose.msra.mxu0 0.0
    %563 = vmatprep.subr.mxu0 0.0
    %564 = vmatpush1.xpose.msra.mxu0 0.0
    %565 = vmatprep.subr.mxu0 0.0
    %566 = vmatpush1.xpose.msra.mxu0 0.0
    %567 = vmatprep.subr.mxu0 0.0
    %568 = vmatpush1.xpose.msra.mxu0 0.0
    %569 = vmatprep.subr.mxu0 0.0
    %570 = vmatpush1.xpose.msra.mxu0 0.0
    %571 = vmatprep.mubr.f32.mxu0 0.0
    %572 = vmatmul.mubr.f32.gmra.mrb[0].mxu0 %v503
    %v573 = vpop.f32.mrb[0].mxu0
    %v574 = vadd.f32 0.0, %v573
    %v575 = vpop.f32.mrb[0].mxu0
    %576 = vdwg.mxu0
    %v577 = vmul.f32 %v574, 0.35355338
    %v578 = vsel %vm159, %v577, -inf
    %579 = vmax.xlane.f32.xlu0 %v578
    %v580 = vpop.xlane.xlu0 %579
    %v581 = vsub.f32 %v577, %v580
    %v582 = vmul.f32 %v581, 1.442695
    %v583 = vpow.pop %v582
    %v584 = vsel %vm159, %v583, 0.0
    %585 = vadd.xlane.f32.xlu0 %v584
    %v586 = vpop.xlane.xlu0 %585
    %v587 = vrcp.pop %v586
    %588 = vrot.lane.b32.xlu0 %v497, 48
    %v589 = vpop.permute.xlu0 %588
    %v592 = vsel %vm159, %v583, 0
    %594 = vmatprep.subr.mxu0 0.0
    %595 = vmatpush1.msra.mxu0 %v589
    %596 = vmatprep.subr.mxu0 0.0
    %597 = vmatpush1.msra.mxu0 0.0
    %598 = vmatprep.subr.mxu0 0.0
    %599 = vmatpush1.msra.mxu0 0.0
    %600 = vmatprep.subr.mxu0 0.0
    %601 = vmatpush1.msra.mxu0 0.0
    %602 = vmatprep.subr.mxu0 0.0
    %603 = vmatpush1.msra.mxu0 0.0
    %604 = vmatprep.subr.mxu0 0.0
    %605 = vmatpush1.msra.mxu0 0.0
    %606 = vmatprep.subr.mxu0 0.0
    %607 = vmatpush1.msra.mxu0 0.0
    %608 = vmatprep.subr.mxu0 0.0
    %609 = vmatpush1.msra.mxu0 0.0
    %610 = vmatprep.subr.mxu0 0.0
    %611 = vmatpush1.msra.mxu0 0.0
    %612 = vmatprep.subr.mxu0 0.0
    %613 = vmatpush1.msra.mxu0 0.0
    %614 = vmatprep.subr.mxu0 0.0
    %615 = vmatpush1.msra.mxu0 0.0
    %616 = vmatprep.subr.mxu0 0.0
    %617 = vmatpush1.msra.mxu0 0.0
    %618 = vmatprep.subr.mxu0 0.0
    %619 = vmatpush1.msra.mxu0 0.0
    %620 = vmatprep.subr.mxu0 0.0
    %621 = vmatpush1.msra.mxu0 0.0
    %622 = vmatprep.subr.mxu0 0.0
    %623 = vmatpush1.msra.mxu0 0.0
    %624 = vmatprep.subr.mxu0 0.0
    %625 = vmatpush1.msra.mxu0 0.0
    %626 = vmatprep.subr.mxu0 0.0
    %627 = vmatpush1.msra.mxu0 0.0
    %628 = vmatprep.subr.mxu0 0.0
    %629 = vmatpush1.msra.mxu0 0.0
    %630 = vmatprep.subr.mxu0 0.0
    %631 = vmatpush1.msra.mxu0 0.0
    %632 = vmatprep.subr.mxu0 0.0
    %633 = vmatpush1.msra.mxu0 0.0
    %634 = vmatprep.subr.mxu0 0.0
    %635 = vmatpush1.msra.mxu0 0.0
    %636 = vmatprep.subr.mxu0 0.0
    %637 = vmatpush1.msra.mxu0 0.0
    %638 = vmatprep.subr.mxu0 0.0
    %639 = vmatpush1.msra.mxu0 0.0
    %640 = vmatprep.subr.mxu0 0.0
    %641 = vmatpush1.msra.mxu0 0.0
    %642 = vmatprep.subr.mxu0 0.0
    %643 = vmatpush1.msra.mxu0 0.0
    %644 = vmatprep.subr.mxu0 0.0
    %645 = vmatpush1.msra.mxu0 0.0
    %646 = vmatprep.subr.mxu0 0.0
    %647 = vmatpush1.msra.mxu0 0.0
    %648 = vmatprep.subr.mxu0 0.0
    %649 = vmatpush1.msra.mxu0 0.0
    %650 = vmatprep.subr.mxu0 0.0
    %651 = vmatpush1.msra.mxu0 0.0
    %652 = vmatprep.subr.mxu0 0.0
    %653 = vmatpush1.msra.mxu0 0.0
    %654 = vmatprep.subr.mxu0 0.0
    %655 = vmatpush1.msra.mxu0 0.0
    %656 = vmatprep.subr.mxu0 0.0
    %657 = vmatpush1.msra.mxu0 0.0
    %658 = vmatprep.mubr.f32.mxu0 0.0
    %659 = vmatmul.mubr.f32.gmra.mrb[0].mxu0 %v592
    %v660 = vpop.f32.mrb[0].mxu0
    %v661 = vadd.f32 0.0, %v660
    %v662 = vpop.f32.mrb[0].mxu0
    %663 = vdwg.mxu0
    %v664 = vmul.f32 %v661, %v587
    %666 = vrot.lane.b32.xlu0 %v664, 16
    %v667 = vpop.permute.xlu0 %666
    %vm669 = vcmask 195712
    %670 = vst.msk [vmem:[#allocation3] sm:$0xff] %vm669, %v667
    %v671 = vld [vmem:[#allocation2] sm:$0xff]
    %673 = vrot.lane.b32.xlu0 %v671, 104
    %v674 = vpop.permute.xlu0 %673
    %675 = vrot.lane.b32.xlu0 %v671, 72
    %v676 = vpop.permute.xlu0 %675
    %v677 = vsel %vm159, %v674, 0
    %v679 = vsel %vm159, %v676, 0
    %681 = vmatprep.subr.mxu0 0.0
    %682 = vmatpush1.xpose.msra.mxu0 %v679
    %683 = vmatprep.subr.mxu0 0.0
    %684 = vmatpush1.xpose.msra.mxu0 0.0
    %685 = vmatprep.subr.mxu0 0.0
    %686 = vmatpush1.xpose.msra.mxu0 0.0
    %687 = vmatprep.subr.mxu0 0.0
    %688 = vmatpush1.xpose.msra.mxu0 0.0
    %689 = vmatprep.subr.mxu0 0.0
    %690 = vmatpush1.xpose.msra.mxu0 0.0
    %691 = vmatprep.subr.mxu0 0.0
    %692 = vmatpush1.xpose.msra.mxu0 0.0
    %693 = vmatprep.subr.mxu0 0.0
    %694 = vmatpush1.xpose.msra.mxu0 0.0
    %695 = vmatprep.subr.mxu0 0.0
    %696 = vmatpush1.xpose.msra.mxu0 0.0
    %697 = vmatprep.subr.mxu0 0.0
    %698 = vmatpush1.xpose.msra.mxu0 0.0
    %699 = vmatprep.subr.mxu0 0.0
    %700 = vmatpush1.xpose.msra.mxu0 0.0
    %701 = vmatprep.subr.mxu0 0.0
    %702 = vmatpush1.xpose.msra.mxu0 0.0
    %703 = vmatprep.subr.mxu0 0.0
    %704 = vmatpush1.xpose.msra.mxu0 0.0
    %705 = vmatprep.subr.mxu0 0.0
    %706 = vmatpush1.xpose.msra.mxu0 0.0
    %707 = vmatprep.subr.mxu0 0.0
    %708 = vmatpush1.xpose.msra.mxu0 0.0
    %709 = vmatprep.subr.mxu0 0.0
    %710 = vmatpush1.xpose.msra.mxu0 0.0
    %711 = vmatprep.subr.mxu0 0.0
    %712 = vmatpush1.xpose.msra.mxu0 0.0
    %713 = vmatprep.subr.mxu0 0.0
    %714 = vmatpush1.xpose.msra.mxu0 0.0
    %715 = vmatprep.subr.mxu0 0.0
    %716 = vmatpush1.xpose.msra.mxu0 0.0
    %717 = vmatprep.subr.mxu0 0.0
    %718 = vmatpush1.xpose.msra.mxu0 0.0
    %719 = vmatprep.subr.mxu0 0.0
    %720 = vmatpush1.xpose.msra.mxu0 0.0
    %721 = vmatprep.subr.mxu0 0.0
    %722 = vmatpush1.xpose.msra.mxu0 0.0
    %723 = vmatprep.subr.mxu0 0.0
    %724 = vmatpush1.xpose.msra.mxu0 0.0
    %725 = vmatprep.subr.mxu0 0.0
    %726 = vmatpush1.xpose.msra.mxu0 0.0
    %727 = vmatprep.subr.mxu0 0.0
    %728 = vmatpush1.xpose.msra.mxu0 0.0
    %729 = vmatprep.subr.mxu0 0.0
    %730 = vmatpush1.xpose.msra.mxu0 0.0
    %731 = vmatprep.subr.mxu0 0.0
    %732 = vmatpush1.xpose.msra.mxu0 0.0
    %733 = vmatprep.subr.mxu0 0.0
    %734 = vmatpush1.xpose.msra.mxu0 0.0
    %735 = vmatprep.subr.mxu0 0.0
    %736 = vmatpush1.xpose.msra.mxu0 0.0
    %737 = vmatprep.subr.mxu0 0.0
    %738 = vmatpush1.xpose.msra.mxu0 0.0
    %739 = vmatprep.subr.mxu0 0.0
    %740 = vmatpush1.xpose.msra.mxu0 0.0
    %741 = vmatprep.subr.mxu0 0.0
    %742 = vmatpush1.xpose.msra.mxu0 0.0
    %743 = vmatprep.subr.mxu0 0.0
    %744 = vmatpush1.xpose.msra.mxu0 0.0
    %745 = vmatprep.mubr.f32.mxu0 0.0
    %746 = vmatmul.mubr.f32.gmra.mrb[0].mxu0 %v677
    %v747 = vpop.f32.mrb[0].mxu0
    %v748 = vadd.f32 0.0, %v747
    %v749 = vpop.f32.mrb[0].mxu0
    %750 = vdwg.mxu0
    %v751 = vmul.f32 %v748, 0.35355338
    %v752 = vsel %vm159, %v751, -inf
    %753 = vmax.xlane.f32.xlu0 %v752
    %v754 = vpop.xlane.xlu0 %753
    %v755 = vsub.f32 %v751, %v754
    %v756 = vmul.f32 %v755, 1.442695
    %v757 = vpow.pop %v756
    %v758 = vsel %vm159, %v757, 0.0
    %759 = vadd.xlane.f32.xlu0 %v758
    %v760 = vpop.xlane.xlu0 %759
    %v761 = vrcp.pop %v760
    %762 = vrot.lane.b32.xlu0 %v671, 40
    %v763 = vpop.permute.xlu0 %762
    %v766 = vsel %vm159, %v757, 0
    %768 = vmatprep.subr.mxu0 0.0
    %769 = vmatpush1.msra.mxu0 %v763
    %770 = vmatprep.subr.mxu0 0.0
    %771 = vmatpush1.msra.mxu0 0.0
    %772 = vmatprep.subr.mxu0 0.0
    %773 = vmatpush1.msra.mxu0 0.0
    %774 = vmatprep.subr.mxu0 0.0
    %775 = vmatpush1.msra.mxu0 0.0
    %776 = vmatprep.subr.mxu0 0.0
    %777 = vmatpush1.msra.mxu0 0.0
    %778 = vmatprep.subr.mxu0 0.0
    %779 = vmatpush1.msra.mxu0 0.0
    %780 = vmatprep.subr.mxu0 0.0
    %781 = vmatpush1.msra.mxu0 0.0
    %782 = vmatprep.subr.mxu0 0.0
    %783 = vmatpush1.msra.mxu0 0.0
    %784 = vmatprep.subr.mxu0 0.0
    %785 = vmatpush1.msra.mxu0 0.0
    %786 = vmatprep.subr.mxu0 0.0
    %787 = vmatpush1.msra.mxu0 0.0
    %788 = vmatprep.subr.mxu0 0.0
    %789 = vmatpush1.msra.mxu0 0.0
    %790 = vmatprep.subr.mxu0 0.0
    %791 = vmatpush1.msra.mxu0 0.0
    %792 = vmatprep.subr.mxu0 0.0
    %793 = vmatpush1.msra.mxu0 0.0
    %794 = vmatprep.subr.mxu0 0.0
    %795 = vmatpush1.msra.mxu0 0.0
    %796 = vmatprep.subr.mxu0 0.0
    %797 = vmatpush1.msra.mxu0 0.0
    %798 = vmatprep.subr.mxu0 0.0
    %799 = vmatpush1.msra.mxu0 0.0
    %800 = vmatprep.subr.mxu0 0.0
    %801 = vmatpush1.msra.mxu0 0.0
    %802 = vmatprep.subr.mxu0 0.0
    %803 = vmatpush1.msra.mxu0 0.0
    %804 = vmatprep.subr.mxu0 0.0
    %805 = vmatpush1.msra.mxu0 0.0
    %806 = vmatprep.subr.mxu0 0.0
    %807 = vmatpush1.msra.mxu0 0.0
    %808 = vmatprep.subr.mxu0 0.0
    %809 = vmatpush1.msra.mxu0 0.0
    %810 = vmatprep.subr.mxu0 0.0
    %811 = vmatpush1.msra.mxu0 0.0
    %812 = vmatprep.subr.mxu0 0.0
    %813 = vmatpush1.msra.mxu0 0.0
    %814 = vmatprep.subr.mxu0 0.0
    %815 = vmatpush1.msra.mxu0 0.0
    %816 = vmatprep.subr.mxu0 0.0
    %817 = vmatpush1.msra.mxu0 0.0
    %818 = vmatprep.subr.mxu0 0.0
    %819 = vmatpush1.msra.mxu0 0.0
    %820 = vmatprep.subr.mxu0 0.0
    %821 = vmatpush1.msra.mxu0 0.0
    %822 = vmatprep.subr.mxu0 0.0
    %823 = vmatpush1.msra.mxu0 0.0
    %824 = vmatprep.subr.mxu0 0.0
    %825 = vmatpush1.msra.mxu0 0.0
    %826 = vmatprep.subr.mxu0 0.0
    %827 = vmatpush1.msra.mxu0 0.0
    %828 = vmatprep.subr.mxu0 0.0
    %829 = vmatpush1.msra.mxu0 0.0
    %830 = vmatprep.subr.mxu0 0.0
    %831 = vmatpush1.msra.mxu0 0.0
    %832 = vmatprep.mubr.f32.mxu0 0.0
    %833 = vmatmul.mubr.f32.gmra.mrb[0].mxu0 %v766
    %v834 = vpop.f32.mrb[0].mxu0
    %v835 = vadd.f32 0.0, %v834
    %v836 = vpop.f32.mrb[0].mxu0
    %837 = vdwg.mxu0
    %v838 = vmul.f32 %v835, %v761
    %840 = vrot.lane.b32.xlu0 %v838, 24
    %v841 = vpop.permute.xlu0 %840
    %vm843 = vcmask 261312
    %844 = vst.msk [vmem:[#allocation3] sm:$0xff] %vm843, %v841
    %v845 = vld [vmem:[#allocation2 + $0x8] sm:$0xff]
    %847 = vrot.lane.b32.xlu0 %v845, 96
    %v848 = vpop.permute.xlu0 %847
    %v849 = vsel %vm159, %v845, 0
    %v851 = vsel %vm159, %v848, 0
    %853 = vmatprep.subr.mxu0 0.0
    %854 = vmatpush1.xpose.msra.mxu0 %v851
    %855 = vmatprep.subr.mxu0 0.0
    %856 = vmatpush1.xpose.msra.mxu0 0.0
    %857 = vmatprep.subr.mxu0 0.0
    %858 = vmatpush1.xpose.msra.mxu0 0.0
    %859 = vmatprep.subr.mxu0 0.0
    %860 = vmatpush1.xpose.msra.mxu0 0.0
    %861 = vmatprep.subr.mxu0 0.0
    %862 = vmatpush1.xpose.msra.mxu0 0.0
    %863 = vmatprep.subr.mxu0 0.0
    %864 = vmatpush1.xpose.msra.mxu0 0.0
    %865 = vmatprep.subr.mxu0 0.0
    %866 = vmatpush1.xpose.msra.mxu0 0.0
    %867 = vmatprep.subr.mxu0 0.0
    %868 = vmatpush1.xpose.msra.mxu0 0.0
    %869 = vmatprep.subr.mxu0 0.0
    %870 = vmatpush1.xpose.msra.mxu0 0.0
    %871 = vmatprep.subr.mxu0 0.0
    %872 = vmatpush1.xpose.msra.mxu0 0.0
    %873 = vmatprep.subr.mxu0 0.0
    %874 = vmatpush1.xpose.msra.mxu0 0.0
    %875 = vmatprep.subr.mxu0 0.0
    %876 = vmatpush1.xpose.msra.mxu0 0.0
    %877 = vmatprep.subr.mxu0 0.0
    %878 = vmatpush1.xpose.msra.mxu0 0.0
    %879 = vmatprep.subr.mxu0 0.0
    %880 = vmatpush1.xpose.msra.mxu0 0.0
    %881 = vmatprep.subr.mxu0 0.0
    %882 = vmatpush1.xpose.msra.mxu0 0.0
    %883 = vmatprep.subr.mxu0 0.0
    %884 = vmatpush1.xpose.msra.mxu0 0.0
    %885 = vmatprep.subr.mxu0 0.0
    %886 = vmatpush1.xpose.msra.mxu0 0.0
    %887 = vmatprep.subr.mxu0 0.0
    %888 = vmatpush1.xpose.msra.mxu0 0.0
    %889 = vmatprep.subr.mxu0 0.0
    %890 = vmatpush1.xpose.msra.mxu0 0.0
    %891 = vmatprep.subr.mxu0 0.0
    %892 = vmatpush1.xpose.msra.mxu0 0.0
    %893 = vmatprep.subr.mxu0 0.0
    %894 = vmatpush1.xpose.msra.mxu0 0.0
    %895 = vmatprep.subr.mxu0 0.0
    %896 = vmatpush1.xpose.msra.mxu0 0.0
    %897 = vmatprep.subr.mxu0 0.0
    %898 = vmatpush1.xpose.msra.mxu0 0.0
    %899 = vmatprep.subr.mxu0 0.0
    %900 = vmatpush1.xpose.msra.mxu0 0.0
    %901 = vmatprep.subr.mxu0 0.0
    %902 = vmatpush1.xpose.msra.mxu0 0.0
    %903 = vmatprep.subr.mxu0 0.0
    %904 = vmatpush1.xpose.msra.mxu0 0.0
    %905 = vmatprep.subr.mxu0 0.0
    %906 = vmatpush1.xpose.msra.mxu0 0.0
    %907 = vmatprep.subr.mxu0 0.0
    %908 = vmatpush1.xpose.msra.mxu0 0.0
    %909 = vmatprep.subr.mxu0 0.0
    %910 = vmatpush1.xpose.msra.mxu0 0.0
    %911 = vmatprep.subr.mxu0 0.0
    %912 = vmatpush1.xpose.msra.mxu0 0.0
    %913 = vmatprep.subr.mxu0 0.0
    %914 = vmatpush1.xpose.msra.mxu0 0.0
    %915 = vmatprep.subr.mxu0 0.0
    %916 = vmatpush1.xpose.msra.mxu0 0.0
    %917 = vmatprep.mubr.f32.mxu0 0.0
    %918 = vmatmul.mubr.f32.gmra.mrb[0].mxu0 %v849
    %v919 = vpop.f32.mrb[0].mxu0
    %v920 = vadd.f32 0.0, %v919
    %v921 = vpop.f32.mrb[0].mxu0
    %922 = vdwg.mxu0
    %v923 = vmul.f32 %v920, 0.35355338
    %v924 = vsel %vm159, %v923, -inf
    %925 = vmax.xlane.f32.xlu0 %v924
    %v926 = vpop.xlane.xlu0 %925
    %v927 = vsub.f32 %v923, %v926
    %v928 = vmul.f32 %v927, 1.442695
    %v929 = vpow.pop %v928
    %v930 = vsel %vm159, %v929, 0.0
    %931 = vadd.xlane.f32.xlu0 %v930
    %v932 = vpop.xlane.xlu0 %931
    %v933 = vrcp.pop %v932
    %934 = vrot.lane.b32.xlu0 %v845, 64
    %v935 = vpop.permute.xlu0 %934
    %v938 = vsel %vm159, %v929, 0
    %940 = vmatprep.subr.mxu0 0.0
    %941 = vmatpush1.msra.mxu0 %v935
    %942 = vmatprep.subr.mxu0 0.0
    %943 = vmatpush1.msra.mxu0 0.0
    %944 = vmatprep.subr.mxu0 0.0
    %945 = vmatpush1.msra.mxu0 0.0
    %946 = vmatprep.subr.mxu0 0.0
    %947 = vmatpush1.msra.mxu0 0.0
    %948 = vmatprep.subr.mxu0 0.0
    %949 = vmatpush1.msra.mxu0 0.0
    %950 = vmatprep.subr.mxu0 0.0
    %951 = vmatpush1.msra.mxu0 0.0
    %952 = vmatprep.subr.mxu0 0.0
    %953 = vmatpush1.msra.mxu0 0.0
    %954 = vmatprep.subr.mxu0 0.0
    %955 = vmatpush1.msra.mxu0 0.0
    %956 = vmatprep.subr.mxu0 0.0
    %957 = vmatpush1.msra.mxu0 0.0
    %958 = vmatprep.subr.mxu0 0.0
    %959 = vmatpush1.msra.mxu0 0.0
    %960 = vmatprep.subr.mxu0 0.0
    %961 = vmatpush1.msra.mxu0 0.0
    %962 = vmatprep.subr.mxu0 0.0
    %963 = vmatpush1.msra.mxu0 0.0
    %964 = vmatprep.subr.mxu0 0.0
    %965 = vmatpush1.msra.mxu0 0.0
    %966 = vmatprep.subr.mxu0 0.0
    %967 = vmatpush1.msra.mxu0 0.0
    %968 = vmatprep.subr.mxu0 0.0
    %969 = vmatpush1.msra.mxu0 0.0
    %970 = vmatprep.subr.mxu0 0.0
    %971 = vmatpush1.msra.mxu0 0.0
    %972 = vmatprep.subr.mxu0 0.0
    %973 = vmatpush1.msra.mxu0 0.0
    %974 = vmatprep.subr.mxu0 0.0
    %975 = vmatpush1.msra.mxu0 0.0
    %976 = vmatprep.subr.mxu0 0.0
    %977 = vmatpush1.msra.mxu0 0.0
    %978 = vmatprep.subr.mxu0 0.0
    %979 = vmatpush1.msra.mxu0 0.0
    %980 = vmatprep.subr.mxu0 0.0
    %981 = vmatpush1.msra.mxu0 0.0
    %982 = vmatprep.subr.mxu0 0.0
    %983 = vmatpush1.msra.mxu0 0.0
    %984 = vmatprep.subr.mxu0 0.0
    %985 = vmatpush1.msra.mxu0 0.0
    %986 = vmatprep.subr.mxu0 0.0
    %987 = vmatpush1.msra.mxu0 0.0
    %988 = vmatprep.subr.mxu0 0.0
    %989 = vmatpush1.msra.mxu0 0.0
    %990 = vmatprep.subr.mxu0 0.0
    %991 = vmatpush1.msra.mxu0 0.0
    %992 = vmatprep.subr.mxu0 0.0
    %993 = vmatpush1.msra.mxu0 0.0
    %994 = vmatprep.subr.mxu0 0.0
    %995 = vmatpush1.msra.mxu0 0.0
    %996 = vmatprep.subr.mxu0 0.0
    %997 = vmatpush1.msra.mxu0 0.0
    %998 = vmatprep.subr.mxu0 0.0
    %999 = vmatpush1.msra.mxu0 0.0
    %1000 = vmatprep.subr.mxu0 0.0
    %1001 = vmatpush1.msra.mxu0 0.0
    %1002 = vmatprep.subr.mxu0 0.0
    %1003 = vmatpush1.msra.mxu0 0.0
    %1004 = vmatprep.mubr.f32.mxu0 0.0
    %1005 = vmatmul.mubr.f32.gmra.mrb[0].mxu0 %v938
    %v1006 = vpop.f32.mrb[0].mxu0
    %v1007 = vadd.f32 0.0, %v1006
    %v1008 = vpop.f32.mrb[0].mxu0
    %1009 = vdwg.mxu0
    %v1010 = vmul.f32 %v1007, %v933
    %1011 = vst.msk [vmem:[#allocation3 + $0x8] sm:$0xff] %vm159, %v1010
    %v1012 = vld [vmem:[#allocation2 + $0x8] sm:$0xff]
    %1014 = vrot.lane.b32.xlu0 %v1012, 120
    %v1015 = vpop.permute.xlu0 %1014
    %1016 = vrot.lane.b32.xlu0 %v1012, 88
    %v1017 = vpop.permute.xlu0 %1016
    %v1018 = vsel %vm159, %v1015, 0
    %v1020 = vsel %vm159, %v1017, 0
    %1022 = vmatprep.subr.mxu0 0.0
    %1023 = vmatpush1.xpose.msra.mxu0 %v1020
    %1024 = vmatprep.subr.mxu0 0.0
    %1025 = vmatpush1.xpose.msra.mxu0 0.0
    %1026 = vmatprep.subr.mxu0 0.0
    %1027 = vmatpush1.xpose.msra.mxu0 0.0
    %1028 = vmatprep.subr.mxu0 0.0
    %1029 = vmatpush1.xpose.msra.mxu0 0.0
    %1030 = vmatprep.subr.mxu0 0.0
    %1031 = vmatpush1.xpose.msra.mxu0 0.0
    %1032 = vmatprep.subr.mxu0 0.0
    %1033 = vmatpush1.xpose.msra.mxu0 0.0
    %1034 = vmatprep.subr.mxu0 0.0
    %1035 = vmatpush1.xpose.msra.mxu0 0.0
    %1036 = vmatprep.subr.mxu0 0.0
    %1037 = vmatpush1.xpose.msra.mxu0 0.0
    %1038 = vmatprep.subr.mxu0 0.0
    %1039 = vmatpush1.xpose.msra.mxu0 0.0
    %1040 = vmatprep.subr.mxu0 0.0
    %1041 = vmatpush1.xpose.msra.mxu0 0.0
    %1042 = vmatprep.subr.mxu0 0.0
    %1043 = vmatpush1.xpose.msra.mxu0 0.0
    %1044 = vmatprep.subr.mxu0 0.0
    %1045 = vmatpush1.xpose.msra.mxu0 0.0
    %1046 = vmatprep.subr.mxu0 0.0
    %1047 = vmatpush1.xpose.msra.mxu0 0.0
    %1048 = vmatprep.subr.mxu0 0.0
    %1049 = vmatpush1.xpose.msra.mxu0 0.0
    %1050 = vmatprep.subr.mxu0 0.0
    %1051 = vmatpush1.xpose.msra.mxu0 0.0
    %1052 = vmatprep.subr.mxu0 0.0
    %1053 = vmatpush1.xpose.msra.mxu0 0.0
    %1054 = vmatprep.subr.mxu0 0.0
    %1055 = vmatpush1.xpose.msra.mxu0 0.0
    %1056 = vmatprep.subr.mxu0 0.0
    %1057 = vmatpush1.xpose.msra.mxu0 0.0
    %1058 = vmatprep.subr.mxu0 0.0
    %1059 = vmatpush1.xpose.msra.mxu0 0.0
    %1060 = vmatprep.subr.mxu0 0.0
    %1061 = vmatpush1.xpose.msra.mxu0 0.0
    %1062 = vmatprep.subr.mxu0 0.0
    %1063 = vmatpush1.xpose.msra.mxu0 0.0
    %1064 = vmatprep.subr.mxu0 0.0
    %1065 = vmatpush1.xpose.msra.mxu0 0.0
    %1066 = vmatprep.subr.mxu0 0.0
    %1067 = vmatpush1.xpose.msra.mxu0 0.0
    %1068 = vmatprep.subr.mxu0 0.0
    %1069 = vmatpush1.xpose.msra.mxu0 0.0
    %1070 = vmatprep.subr.mxu0 0.0
    %1071 = vmatpush1.xpose.msra.mxu0 0.0
    %1072 = vmatprep.subr.mxu0 0.0
    %1073 = vmatpush1.xpose.msra.mxu0 0.0
    %1074 = vmatprep.subr.mxu0 0.0
    %1075 = vmatpush1.xpose.msra.mxu0 0.0
    %1076 = vmatprep.subr.mxu0 0.0
    %1077 = vmatpush1.xpose.msra.mxu0 0.0
    %1078 = vmatprep.subr.mxu0 0.0
    %1079 = vmatpush1.xpose.msra.mxu0 0.0
    %1080 = vmatprep.subr.mxu0 0.0
    %1081 = vmatpush1.xpose.msra.mxu0 0.0
    %1082 = vmatprep.subr.mxu0 0.0
    %1083 = vmatpush1.xpose.msra.mxu0 0.0
    %1084 = vmatprep.subr.mxu0 0.0
    %1085 = vmatpush1.xpose.msra.mxu0 0.0
    %1086 = vmatprep.mubr.f32.mxu0 0.0
    %1087 = vmatmul.mubr.f32.gmra.mrb[0].mxu0 %v1018
    %v1088 = vpop.f32.mrb[0].mxu0
    %v1089 = vadd.f32 0.0, %v1088
    %v1090 = vpop.f32.mrb[0].mxu0
    %1091 = vdwg.mxu0
    %v1092 = vmul.f32 %v1089, 0.35355338
    %v1093 = vsel %vm159, %v1092, -inf
    %1094 = vmax.xlane.f32.xlu0 %v1093
    %v1095 = vpop.xlane.xlu0 %1094
    %v1096 = vsub.f32 %v1092, %v1095
    %v1097 = vmul.f32 %v1096, 1.442695
    %v1098 = vpow.pop %v1097
    %v1099 = vsel %vm159, %v1098, 0.0
    %1100 = vadd.xlane.f32.xlu0 %v1099
    %v1101 = vpop.xlane.xlu0 %1100
    %v1102 = vrcp.pop %v1101
    %1103 = vrot.lane.b32.xlu0 %v1012, 56
    %v1104 = vpop.permute.xlu0 %1103
    %v1107 = vsel %vm159, %v1098, 0
    %1109 = vmatprep.subr.mxu0 0.0
    %1110 = vmatpush1.msra.mxu0 %v1104
    %1111 = vmatprep.subr.mxu0 0.0
    %1112 = vmatpush1.msra.mxu0 0.0
    %1113 = vmatprep.subr.mxu0 0.0
    %1114 = vmatpush1.msra.mxu0 0.0
    %1115 = vmatprep.subr.mxu0 0.0
    %1116 = vmatpush1.msra.mxu0 0.0
    %1117 = vmatprep.subr.mxu0 0.0
    %1118 = vmatpush1.msra.mxu0 0.0
    %1119 = vmatprep.subr.mxu0 0.0
    %1120 = vmatpush1.msra.mxu0 0.0
    %1121 = vmatprep.subr.mxu0 0.0
    %1122 = vmatpush1.msra.mxu0 0.0
    %1123 = vmatprep.subr.mxu0 0.0
    %1124 = vmatpush1.msra.mxu0 0.0
    %1125 = vmatprep.subr.mxu0 0.0
    %1126 = vmatpush1.msra.mxu0 0.0
    %1127 = vmatprep.subr.mxu0 0.0
    %1128 = vmatpush1.msra.mxu0 0.0
    %1129 = vmatprep.subr.mxu0 0.0
    %1130 = vmatpush1.msra.mxu0 0.0
    %1131 = vmatprep.subr.mxu0 0.0
    %1132 = vmatpush1.msra.mxu0 0.0
    %1133 = vmatprep.subr.mxu0 0.0
    %1134 = vmatpush1.msra.mxu0 0.0
    %1135 = vmatprep.subr.mxu0 0.0
    %1136 = vmatpush1.msra.mxu0 0.0
    %1137 = vmatprep.subr.mxu0 0.0
    %1138 = vmatpush1.msra.mxu0 0.0
    %1139 = vmatprep.subr.mxu0 0.0
    %1140 = vmatpush1.msra.mxu0 0.0
    %1141 = vmatprep.subr.mxu0 0.0
    %1142 = vmatpush1.msra.mxu0 0.0
    %1143 = vmatprep.subr.mxu0 0.0
    %1144 = vmatpush1.msra.mxu0 0.0
    %1145 = vmatprep.subr.mxu0 0.0
    %1146 = vmatpush1.msra.mxu0 0.0
    %1147 = vmatprep.subr.mxu0 0.0
    %1148 = vmatpush1.msra.mxu0 0.0
    %1149 = vmatprep.subr.mxu0 0.0
    %1150 = vmatpush1.msra.mxu0 0.0
    %1151 = vmatprep.subr.mxu0 0.0
    %1152 = vmatpush1.msra.mxu0 0.0
    %1153 = vmatprep.subr.mxu0 0.0
    %1154 = vmatpush1.msra.mxu0 0.0
    %1155 = vmatprep.subr.mxu0 0.0
    %1156 = vmatpush1.msra.mxu0 0.0
    %1157 = vmatprep.subr.mxu0 0.0
    %1158 = vmatpush1.msra.mxu0 0.0
    %1159 = vmatprep.subr.mxu0 0.0
    %1160 = vmatpush1.msra.mxu0 0.0
    %1161 = vmatprep.subr.mxu0 0.0
    %1162 = vmatpush1.msra.mxu0 0.0
    %1163 = vmatprep.subr.mxu0 0.0
    %1164 = vmatpush1.msra.mxu0 0.0
    %1165 = vmatprep.subr.mxu0 0.0
    %1166 = vmatpush1.msra.mxu0 0.0
    %1167 = vmatprep.subr.mxu0 0.0
    %1168 = vmatpush1.msra.mxu0 0.0
    %1169 = vmatprep.subr.mxu0 0.0
    %1170 = vmatpush1.msra.mxu0 0.0
    %1171 = vmatprep.subr.mxu0 0.0
    %1172 = vmatpush1.msra.mxu0 0.0
    %1173 = vmatprep.mubr.f32.mxu0 0.0
    %1174 = vmatmul.mubr.f32.gmra.mrb[0].mxu0 %v1107
    %v1175 = vpop.f32.mrb[0].mxu0
    %v1176 = vadd.f32 0.0, %v1175
    %v1177 = vpop.f32.mrb[0].mxu0
    %1178 = vdwg.mxu0
    %v1179 = vmul.f32 %v1176, %v1102
    %1181 = vrot.lane.b32.xlu0 %v1179, 8
    %v1182 = vpop.permute.xlu0 %1181
    %1184 = vst.msk [vmem:[#allocation3 + $0x8] sm:$0xff] %vm495, %v1182
    %v1185 = vld [vmem:[#allocation2 + $0x8] sm:$0xff]
    %1187 = vrot.lane.b32.xlu0 %v1185, 112
    %v1188 = vpop.permute.xlu0 %1187
    %1189 = vrot.lane.b32.xlu0 %v1185, 80
    %v1190 = vpop.permute.xlu0 %1189
    %v1191 = vsel %vm159, %v1188, 0
    %v1193 = vsel %vm159, %v1190, 0
    %1195 = vmatprep.subr.mxu0 0.0
    %1196 = vmatpush1.xpose.msra.mxu0 %v1193
    %1197 = vmatprep.subr.mxu0 0.0
    %1198 = vmatpush1.xpose.msra.mxu0 0.0
    %1199 = vmatprep.subr.mxu0 0.0
    %1200 = vmatpush1.xpose.msra.mxu0 0.0
    %1201 = vmatprep.subr.mxu0 0.0
    %1202 = vmatpush1.xpose.msra.mxu0 0.0
    %1203 = vmatprep.subr.mxu0 0.0
    %1204 = vmatpush1.xpose.msra.mxu0 0.0
    %1205 = vmatprep.subr.mxu0 0.0
    %1206 = vmatpush1.xpose.msra.mxu0 0.0
    %1207 = vmatprep.subr.mxu0 0.0
    %1208 = vmatpush1.xpose.msra.mxu0 0.0
    %1209 = vmatprep.subr.mxu0 0.0
    %1210 = vmatpush1.xpose.msra.mxu0 0.0
    %1211 = vmatprep.subr.mxu0 0.0
    %1212 = vmatpush1.xpose.msra.mxu0 0.0
    %1213 = vmatprep.subr.mxu0 0.0
    %1214 = vmatpush1.xpose.msra.mxu0 0.0
    %1215 = vmatprep.subr.mxu0 0.0
    %1216 = vmatpush1.xpose.msra.mxu0 0.0
    %1217 = vmatprep.subr.mxu0 0.0
    %1218 = vmatpush1.xpose.msra.mxu0 0.0
    %1219 = vmatprep.subr.mxu0 0.0
    %1220 = vmatpush1.xpose.msra.mxu0 0.0
    %1221 = vmatprep.subr.mxu0 0.0
    %1222 = vmatpush1.xpose.msra.mxu0 0.0
    %1223 = vmatprep.subr.mxu0 0.0
    %1224 = vmatpush1.xpose.msra.mxu0 0.0
    %1225 = vmatprep.subr.mxu0 0.0
    %1226 = vmatpush1.xpose.msra.mxu0 0.0
    %1227 = vmatprep.subr.mxu0 0.0
    %1228 = vmatpush1.xpose.msra.mxu0 0.0
    %1229 = vmatprep.subr.mxu0 0.0
    %1230 = vmatpush1.xpose.msra.mxu0 0.0
    %1231 = vmatprep.subr.mxu0 0.0
    %1232 = vmatpush1.xpose.msra.mxu0 0.0
    %1233 = vmatprep.subr.mxu0 0.0
    %1234 = vmatpush1.xpose.msra.mxu0 0.0
    %1235 = vmatprep.subr.mxu0 0.0
    %1236 = vmatpush1.xpose.msra.mxu0 0.0
    %1237 = vmatprep.subr.mxu0 0.0
    %1238 = vmatpush1.xpose.msra.mxu0 0.0
    %1239 = vmatprep.subr.mxu0 0.0
    %1240 = vmatpush1.xpose.msra.mxu0 0.0
    %1241 = vmatprep.subr.mxu0 0.0
    %1242 = vmatpush1.xpose.msra.mxu0 0.0
    %1243 = vmatprep.subr.mxu0 0.0
    %1244 = vmatpush1.xpose.msra.mxu0 0.0
    %1245 = vmatprep.subr.mxu0 0.0
    %1246 = vmatpush1.xpose.msra.mxu0 0.0
    %1247 = vmatprep.subr.mxu0 0.0
    %1248 = vmatpush1.xpose.msra.mxu0 0.0
    %1249 = vmatprep.subr.mxu0 0.0
    %1250 = vmatpush1.xpose.msra.mxu0 0.0
    %1251 = vmatprep.subr.mxu0 0.0
    %1252 = vmatpush1.xpose.msra.mxu0 0.0
    %1253 = vmatprep.subr.mxu0 0.0
    %1254 = vmatpush1.xpose.msra.mxu0 0.0
    %1255 = vmatprep.subr.mxu0 0.0
    %1256 = vmatpush1.xpose.msra.mxu0 0.0
    %1257 = vmatprep.subr.mxu0 0.0
    %1258 = vmatpush1.xpose.msra.mxu0 0.0
    %1259 = vmatprep.mubr.f32.mxu0 0.0
    %1260 = vmatmul.mubr.f32.gmra.mrb[0].mxu0 %v1191
    %v1261 = vpop.f32.mrb[0].mxu0
    %v1262 = vadd.f32 0.0, %v1261
    %v1263 = vpop.f32.mrb[0].mxu0
    %1264 = vdwg.mxu0
    %v1265 = vmul.f32 %v1262, 0.35355338
    %v1266 = vsel %vm159, %v1265, -inf
    %1267 = vmax.xlane.f32.xlu0 %v1266
    %v1268 = vpop.xlane.xlu0 %1267
    %v1269 = vsub.f32 %v1265, %v1268
    %v1270 = vmul.f32 %v1269, 1.442695
    %v1271 = vpow.pop %v1270
    %v1272 = vsel %vm159, %v1271, 0.0
    %1273 = vadd.xlane.f32.xlu0 %v1272
    %v1274 = vpop.xlane.xlu0 %1273
    %v1275 = vrcp.pop %v1274
    %1276 = vrot.lane.b32.xlu0 %v1185, 48
    %v1277 = vpop.permute.xlu0 %1276
    %v1280 = vsel %vm159, %v1271, 0
    %1282 = vmatprep.subr.mxu0 0.0
    %1283 = vmatpush1.msra.mxu0 %v1277
    %1284 = vmatprep.subr.mxu0 0.0
    %1285 = vmatpush1.msra.mxu0 0.0
    %1286 = vmatprep.subr.mxu0 0.0
    %1287 = vmatpush1.msra.mxu0 0.0
    %1288 = vmatprep.subr.mxu0 0.0
    %1289 = vmatpush1.msra.mxu0 0.0
    %1290 = vmatprep.subr.mxu0 0.0
    %1291 = vmatpush1.msra.mxu0 0.0
    %1292 = vmatprep.subr.mxu0 0.0
    %1293 = vmatpush1.msra.mxu0 0.0
    %1294 = vmatprep.subr.mxu0 0.0
    %1295 = vmatpush1.msra.mxu0 0.0
    %1296 = vmatprep.subr.mxu0 0.0
    %1297 = vmatpush1.msra.mxu0 0.0
    %1298 = vmatprep.subr.mxu0 0.0
    %1299 = vmatpush1.msra.mxu0 0.0
    %1300 = vmatprep.subr.mxu0 0.0
    %1301 = vmatpush1.msra.mxu0 0.0
    %1302 = vmatprep.subr.mxu0 0.0
    %1303 = vmatpush1.msra.mxu0 0.0
    %1304 = vmatprep.subr.mxu0 0.0
    %1305 = vmatpush1.msra.mxu0 0.0
    %1306 = vmatprep.subr.mxu0 0.0
    %1307 = vmatpush1.msra.mxu0 0.0
    %1308 = vmatprep.subr.mxu0 0.0
    %1309 = vmatpush1.msra.mxu0 0.0
    %1310 = vmatprep.subr.mxu0 0.0
    %1311 = vmatpush1.msra.mxu0 0.0
    %1312 = vmatprep.subr.mxu0 0.0
    %1313 = vmatpush1.msra.mxu0 0.0
    %1314 = vmatprep.subr.mxu0 0.0
    %1315 = vmatpush1.msra.mxu0 0.0
    %1316 = vmatprep.subr.mxu0 0.0
    %1317 = vmatpush1.msra.mxu0 0.0
    %1318 = vmatprep.subr.mxu0 0.0
    %1319 = vmatpush1.msra.mxu0 0.0
    %1320 = vmatprep.subr.mxu0 0.0
    %1321 = vmatpush1.msra.mxu0 0.0
    %1322 = vmatprep.subr.mxu0 0.0
    %1323 = vmatpush1.msra.mxu0 0.0
    %1324 = vmatprep.subr.mxu0 0.0
    %1325 = vmatpush1.msra.mxu0 0.0
    %1326 = vmatprep.subr.mxu0 0.0
    %1327 = vmatpush1.msra.mxu0 0.0
    %1328 = vmatprep.subr.mxu0 0.0
    %1329 = vmatpush1.msra.mxu0 0.0
    %1330 = vmatprep.subr.mxu0 0.0
    %1331 = vmatpush1.msra.mxu0 0.0
    %1332 = vmatprep.subr.mxu0 0.0
    %1333 = vmatpush1.msra.mxu0 0.0
    %1334 = vmatprep.subr.mxu0 0.0
    %1335 = vmatpush1.msra.mxu0 0.0
    %1336 = vmatprep.subr.mxu0 0.0
    %1337 = vmatpush1.msra.mxu0 0.0
    %1338 = vmatprep.subr.mxu0 0.0
    %1339 = vmatpush1.msra.mxu0 0.0
    %1340 = vmatprep.subr.mxu0 0.0
    %1341 = vmatpush1.msra.mxu0 0.0
    %1342 = vmatprep.subr.mxu0 0.0
    %1343 = vmatpush1.msra.mxu0 0.0
    %1344 = vmatprep.subr.mxu0 0.0
    %1345 = vmatpush1.msra.mxu0 0.0
    %1346 = vmatprep.mubr.f32.mxu0 0.0
    %1347 = vmatmul.mubr.f32.gmra.mrb[0].mxu0 %v1280
    %v1348 = vpop.f32.mrb[0].mxu0
    %v1349 = vadd.f32 0.0, %v1348
    %v1350 = vpop.f32.mrb[0].mxu0
    %1351 = vdwg.mxu0
    %v1352 = vmul.f32 %v1349, %v1275
    %1354 = vrot.lane.b32.xlu0 %v1352, 16
    %v1355 = vpop.permute.xlu0 %1354
    %1357 = vst.msk [vmem:[#allocation3 + $0x8] sm:$0xff] %vm669, %v1355
    %v1358 = vld [vmem:[#allocation2 + $0x8] sm:$0xff]
    %1360 = vrot.lane.b32.xlu0 %v1358, 104
    %v1361 = vpop.permute.xlu0 %1360
    %1362 = vrot.lane.b32.xlu0 %v1358, 72
    %v1363 = vpop.permute.xlu0 %1362
    %v1364 = vsel %vm159, %v1361, 0
    %v1366 = vsel %vm159, %v1363, 0
    %1368 = vmatprep.subr.mxu0 0.0
    %1369 = vmatpush1.xpose.msra.mxu0 %v1366
    %1370 = vmatprep.subr.mxu0 0.0
    %1371 = vmatpush1.xpose.msra.mxu0 0.0
    %1372 = vmatprep.subr.mxu0 0.0
    %1373 = vmatpush1.xpose.msra.mxu0 0.0
    %1374 = vmatprep.subr.mxu0 0.0
    %1375 = vmatpush1.xpose.msra.mxu0 0.0
    %1376 = vmatprep.subr.mxu0 0.0
    %1377 = vmatpush1.xpose.msra.mxu0 0.0
    %1378 = vmatprep.subr.mxu0 0.0
    %1379 = vmatpush1.xpose.msra.mxu0 0.0
    %1380 = vmatprep.subr.mxu0 0.0
    %1381 = vmatpush1.xpose.msra.mxu0 0.0
    %1382 = vmatprep.subr.mxu0 0.0
    %1383 = vmatpush1.xpose.msra.mxu0 0.0
    %1384 = vmatprep.subr.mxu0 0.0
    %1385 = vmatpush1.xpose.msra.mxu0 0.0
    %1386 = vmatprep.subr.mxu0 0.0
    %1387 = vmatpush1.xpose.msra.mxu0 0.0
    %1388 = vmatprep.subr.mxu0 0.0
    %1389 = vmatpush1.xpose.msra.mxu0 0.0
    %1390 = vmatprep.subr.mxu0 0.0
    %1391 = vmatpush1.xpose.msra.mxu0 0.0
    %1392 = vmatprep.subr.mxu0 0.0
    %1393 = vmatpush1.xpose.msra.mxu0 0.0
    %1394 = vmatprep.subr.mxu0 0.0
    %1395 = vmatpush1.xpose.msra.mxu0 0.0
    %1396 = vmatprep.subr.mxu0 0.0
    %1397 = vmatpush1.xpose.msra.mxu0 0.0
    %1398 = vmatprep.subr.mxu0 0.0
    %1399 = vmatpush1.xpose.msra.mxu0 0.0
    %1400 = vmatprep.subr.mxu0 0.0
    %1401 = vmatpush1.xpose.msra.mxu0 0.0
    %1402 = vmatprep.subr.mxu0 0.0
    %1403 = vmatpush1.xpose.msra.mxu0 0.0
    %1404 = vmatprep.subr.mxu0 0.0
    %1405 = vmatpush1.xpose.msra.mxu0 0.0
    %1406 = vmatprep.subr.mxu0 0.0
    %1407 = vmatpush1.xpose.msra.mxu0 0.0
    %1408 = vmatprep.subr.mxu0 0.0
    %1409 = vmatpush1.xpose.msra.mxu0 0.0
    %1410 = vmatprep.subr.mxu0 0.0
    %1411 = vmatpush1.xpose.msra.mxu0 0.0
    %1412 = vmatprep.subr.mxu0 0.0
    %1413 = vmatpush1.xpose.msra.mxu0 0.0
    %1414 = vmatprep.subr.mxu0 0.0
    %1415 = vmatpush1.xpose.msra.mxu0 0.0
    %1416 = vmatprep.subr.mxu0 0.0
    %1417 = vmatpush1.xpose.msra.mxu0 0.0
    %1418 = vmatprep.subr.mxu0 0.0
    %1419 = vmatpush1.xpose.msra.mxu0 0.0
    %1420 = vmatprep.subr.mxu0 0.0
    %1421 = vmatpush1.xpose.msra.mxu0 0.0
    %1422 = vmatprep.subr.mxu0 0.0
    %1423 = vmatpush1.xpose.msra.mxu0 0.0
    %1424 = vmatprep.subr.mxu0 0.0
    %1425 = vmatpush1.xpose.msra.mxu0 0.0
    %1426 = vmatprep.subr.mxu0 0.0
    %1427 = vmatpush1.xpose.msra.mxu0 0.0
    %1428 = vmatprep.subr.mxu0 0.0
    %1429 = vmatpush1.xpose.msra.mxu0 0.0
    %1430 = vmatprep.subr.mxu0 0.0
    %1431 = vmatpush1.xpose.msra.mxu0 0.0
    %1432 = vmatprep.mubr.f32.mxu0 0.0
    %1433 = vmatmul.mubr.f32.gmra.mrb[0].mxu0 %v1364
    %v1434 = vpop.f32.mrb[0].mxu0
    %v1435 = vadd.f32 0.0, %v1434
    %v1436 = vpop.f32.mrb[0].mxu0
    %1437 = vdwg.mxu0
    %v1438 = vmul.f32 %v1435, 0.35355338
    %v1439 = vsel %vm159, %v1438, -inf
    %1440 = vmax.xlane.f32.xlu0 %v1439
    %v1441 = vpop.xlane.xlu0 %1440
    %v1442 = vsub.f32 %v1438, %v1441
    %v1443 = vmul.f32 %v1442, 1.442695
    %v1444 = vpow.pop %v1443
    %v1445 = vsel %vm159, %v1444, 0.0
    %1446 = vadd.xlane.f32.xlu0 %v1445
    %v1447 = vpop.xlane.xlu0 %1446
    %v1448 = vrcp.pop %v1447
    %1449 = vrot.lane.b32.xlu0 %v1358, 40
    %v1450 = vpop.permute.xlu0 %1449
    %v1453 = vsel %vm159, %v1444, 0
    %1455 = vmatprep.subr.mxu0 0.0
    %1456 = vmatpush1.msra.mxu0 %v1450
    %1457 = vmatprep.subr.mxu0 0.0
    %1458 = vmatpush1.msra.mxu0 0.0
    %1459 = vmatprep.subr.mxu0 0.0
    %1460 = vmatpush1.msra.mxu0 0.0
    %1461 = vmatprep.subr.mxu0 0.0
    %1462 = vmatpush1.msra.mxu0 0.0
    %1463 = vmatprep.subr.mxu0 0.0
    %1464 = vmatpush1.msra.mxu0 0.0
    %1465 = vmatprep.subr.mxu0 0.0
    %1466 = vmatpush1.msra.mxu0 0.0
    %1467 = vmatprep.subr.mxu0 0.0
    %1468 = vmatpush1.msra.mxu0 0.0
    %1469 = vmatprep.subr.mxu0 0.0
    %1470 = vmatpush1.msra.mxu0 0.0
    %1471 = vmatprep.subr.mxu0 0.0
    %1472 = vmatpush1.msra.mxu0 0.0
    %1473 = vmatprep.subr.mxu0 0.0
    %1474 = vmatpush1.msra.mxu0 0.0
    %1475 = vmatprep.subr.mxu0 0.0
    %1476 = vmatpush1.msra.mxu0 0.0
    %1477 = vmatprep.subr.mxu0 0.0
    %1478 = vmatpush1.msra.mxu0 0.0
    %1479 = vmatprep.subr.mxu0 0.0
    %1480 = vmatpush1.msra.mxu0 0.0
    %1481 = vmatprep.subr.mxu0 0.0
    %1482 = vmatpush1.msra.mxu0 0.0
    %1483 = vmatprep.subr.mxu0 0.0
    %1484 = vmatpush1.msra.mxu0 0.0
    %1485 = vmatprep.subr.mxu0 0.0
    %1486 = vmatpush1.msra.mxu0 0.0
    %1487 = vmatprep.subr.mxu0 0.0
    %1488 = vmatpush1.msra.mxu0 0.0
    %1489 = vmatprep.subr.mxu0 0.0
    %1490 = vmatpush1.msra.mxu0 0.0
    %1491 = vmatprep.subr.mxu0 0.0
    %1492 = vmatpush1.msra.mxu0 0.0
    %1493 = vmatprep.subr.mxu0 0.0
    %1494 = vmatpush1.msra.mxu0 0.0
    %1495 = vmatprep.subr.mxu0 0.0
    %1496 = vmatpush1.msra.mxu0 0.0
    %1497 = vmatprep.subr.mxu0 0.0
    %1498 = vmatpush1.msra.mxu0 0.0
    %1499 = vmatprep.subr.mxu0 0.0
    %1500 = vmatpush1.msra.mxu0 0.0
    %1501 = vmatprep.subr.mxu0 0.0
    %1502 = vmatpush1.msra.mxu0 0.0
    %1503 = vmatprep.subr.mxu0 0.0
    %1504 = vmatpush1.msra.mxu0 0.0
    %1505 = vmatprep.subr.mxu0 0.0
    %1506 = vmatpush1.msra.mxu0 0.0
    %1507 = vmatprep.subr.mxu0 0.0
    %1508 = vmatpush1.msra.mxu0 0.0
    %1509 = vmatprep.subr.mxu0 0.0
    %1510 = vmatpush1.msra.mxu0 0.0
    %1511 = vmatprep.subr.mxu0 0.0
    %1512 = vmatpush1.msra.mxu0 0.0
    %1513 = vmatprep.subr.mxu0 0.0
    %1514 = vmatpush1.msra.mxu0 0.0
    %1515 = vmatprep.subr.mxu0 0.0
    %1516 = vmatpush1.msra.mxu0 0.0
    %1517 = vmatprep.subr.mxu0 0.0
    %1518 = vmatpush1.msra.mxu0 0.0
    %1519 = vmatprep.mubr.f32.mxu0 0.0
    %1520 = vmatmul.mubr.f32.gmra.mrb[0].mxu0 %v1453
    %v1521 = vpop.f32.mrb[0].mxu0
    %v1522 = vadd.f32 0.0, %v1521
    %v1523 = vpop.f32.mrb[0].mxu0
    %1524 = vdwg.mxu0
    %v1525 = vmul.f32 %v1522, %v1448
    %1527 = vrot.lane.b32.xlu0 %v1525, 24
    %v1528 = vpop.permute.xlu0 %1527
    %1530 = vst.msk [vmem:[#allocation3 + $0x8] sm:$0xff] %vm843, %v1528
    %v1531 = vld [vmem:[#allocation3] sm:$0xff]
    %v1532 = vld [vmem:[#allocation3 + $0x8] sm:$0xff]
    %v1533 = vpack.c.bf16 %v1532, %v1531
    %v1534 = vld [vmem:[%s4] sm:$0xf]
    %v1535 = vld [vmem:[%s4 + $0x4] sm:$0xf]
    %v1536 = vld [vmem:[%s4 + $0x8] sm:$0xf]
    %v1537 = vld [vmem:[%s4 + $0xc] sm:$0xf]
    %v1538 = vld [vmem:[%s5] sm:$0x1]
    %v1540 = vlaneseq
    %v1541 = vshrl.u32 %v1540, 7
    %v1542 = vsub.s32 0, %v1541
    %v1543 = vrot.slane %v1538, %v1542
    %v1549 = vunpack.c.l.b16 %v1534
    %v1550 = vunpack.c.l.b16 %v1535
    %v1551 = vunpack.c.l.b16 %v1536
    %v1552 = vunpack.c.l.b16 %v1537
    %v1553 = vpack.c.b16 %v1550, %v1549
    %v1554 = vpack.c.b16 %v1552, %v1551
    %v1558 = vsel %vm45, %v1533, 0
    %1560 = vmatprep.subr.bf16.mxu0 0
    %1561 = vmatpush1.bf16.msra.mxu0 %v1553
    %1562 = vmatprep.subr.bf16.mxu0 0
    %1563 = vmatpush1.bf16.msra.mxu0 %v1554
    %1564 = vmatprep.subr.bf16.mxu0 0
    %1565 = vmatpush1.bf16.msra.mxu0 0
    %1566 = vmatprep.subr.bf16.mxu0 0
    %1567 = vmatpush1.bf16.msra.mxu0 0
    %1568 = vmatprep.subr.bf16.mxu0 0
    %1569 = vmatpush1.bf16.msra.mxu0 0
    %1570 = vmatprep.subr.bf16.mxu0 0
    %1571 = vmatpush1.bf16.msra.mxu0 0
    %1572 = vmatprep.subr.bf16.mxu0 0
    %1573 = vmatpush1.bf16.msra.mxu0 0
    %1574 = vmatprep.subr.bf16.mxu0 0
    %1575 = vmatpush1.bf16.msra.mxu0 0
    %1576 = vmatprep.subr.bf16.mxu0 0
    %1577 = vmatpush1.bf16.msra.mxu0 0
    %1578 = vmatprep.subr.bf16.mxu0 0
    %1579 = vmatpush1.bf16.msra.mxu0 0
    %1580 = vmatprep.subr.bf16.mxu0 0
    %1581 = vmatpush1.bf16.msra.mxu0 0
    %1582 = vmatprep.subr.bf16.mxu0 0
    %1583 = vmatpush1.bf16.msra.mxu0 0
    %1584 = vmatprep.subr.bf16.mxu0 0
    %1585 = vmatpush1.bf16.msra.mxu0 0
    %1586 = vmatprep.subr.bf16.mxu0 0
    %1587 = vmatpush1.bf16.msra.mxu0 0
    %1588 = vmatprep.subr.bf16.mxu0 0
    %1589 = vmatpush1.bf16.msra.mxu0 0
    %1590 = vmatprep.subr.bf16.mxu0 0
    %1591 = vmatpush1.bf16.msra.mxu0 0
    %1592 = vmatprep.mubr.bf16.mxu0 0
    %1593 = vmatmul.mubr.bf16.gmra.mrb[0].mxu0 %v1558
    %v1594 = vpop.f32.mrb[0].mxu0
    %v1595 = vadd.f32 %v1543, %v1594
    %v1596 = vpop.f32.mrb[0].mxu0
    %v1597 = vpop.f32.mrb[0].mxu0
    %v1598 = vadd.f32 %v1543, %v1597
    %v1599 = vpop.f32.mrb[0].mxu0
    %1600 = vdwg.mxu0
    %v1601 = vadd.f32 %v43, %v1595
    %v1602 = vadd.f32 %v44, %v1598
    %v1603 = vsel %vm45, %v1601, 0.0
    %1604 = vadd.xlane.f32.xlu0 %v1603
    %v1605 = vpop.xlane.xlu0 %1604
    %v1606 = vsel %vm45, %v1602, 0.0
    %1607 = vadd.xlane.f32.xlu0 %v1606
    %v1608 = vpop.xlane.xlu0 %1607
    %v1609 = vmul.f32 %v1605, %v52
    %v1610 = vmul.f32 %v1608, %v52
    %v1611 = vsub.f32 %v1601, %v1609
    %v1612 = vsub.f32 %v1602, %v1610
    %v1613 = vmul.f32 %v1611, %v1611
    %v1614 = vmul.f32 %v1612, %v1612
    %v1615 = vsel %vm45, %v1613, 0.0
    %1616 = vadd.xlane.f32.xlu0 %v1615
    %v1617 = vpop.xlane.xlu0 %1616
    %v1618 = vsel %vm45, %v1614, 0.0
    %1619 = vadd.xlane.f32.xlu0 %v1618
    %v1620 = vpop.xlane.xlu0 %1619
    %v1621 = vmul.f32 %v1617, %v52
    %v1622 = vmul.f32 %v1620, %v52
    %v1623 = vadd.f32 %v1621, 1e-05
    %v1624 = vadd.f32 %v1622, 1e-05
    %v1625 = vrsqrt.pop %v1623
    %v1626 = vrsqrt.pop %v1624
    %v1627 = vmul.f32 %v1611, %v1625
    %v1628 = vmul.f32 %v1612, %v1626
    %v1629 = vld [vmem:[%s6] sm:$0x1]
    %v1631 = vlaneseq
    %v1632 = vshrl.u32 %v1631, 7
    %v1633 = vsub.s32 0, %v1632
    %v1634 = vrot.slane %v1629, %v1633
    %v1636 = vmul.f32 %v1627, %v1634
    %v1637 = vmul.f32 %v1628, %v1634
    %v1638 = vld [vmem:[%s7] sm:$0x1]
    %v1640 = vlaneseq
    %v1641 = vshrl.u32 %v1640, 7
    %v1642 = vsub.s32 0, %v1641
    %v1643 = vrot.slane %v1638, %v1642
    %v1645 = vadd.f32 %v1636, %v1643
    %v1646 = vadd.f32 %v1637, %v1643
    %v1647 = vpack.c.bf16 %v1646, %v1645
    %v1648 = vld [vmem:[%s8] sm:$0xf]
    %v1649 = vld [vmem:[%s8 + $0x4] sm:$0xf]
    %v1650 = vld [vmem:[%s8 + $0x8] sm:$0xf]
    %v1651 = vld [vmem:[%s8 + $0xc] sm:$0xf]
    %v1652 = vld [vmem:[%s9] sm:$0x1]
    %v1654 = vlaneseq
    %v1655 = vshrl.u32 %v1654, 7
    %v1656 = vsub.s32 0, %v1655
    %v1657 = vrot.slane %v1652, %v1656
    %v1663 = vunpack.c.l.b16 %v1648
    %v1664 = vunpack.c.l.b16 %v1649
    %v1665 = vunpack.c.l.b16 %v1650
    %v1666 = vunpack.c.l.b16 %v1651
    %v1667 = vpack.c.b16 %v1664, %v1663
    %v1668 = vpack.c.b16 %v1666, %v1665
    %v1672 = vsel %vm45, %v1647, 0
    %1674 = vmatprep.subr.bf16.mxu0 0
    %1675 = vmatpush1.bf16.msra.mxu0 %v1667
    %1676 = vmatprep.subr.bf16.mxu0 0
    %1677 = vmatpush1.bf16.msra.mxu0 %v1668
    %1678 = vmatprep.subr.bf16.mxu0 0
    %1679 = vmatpush1.bf16.msra.mxu0 0
    %1680 = vmatprep.subr.bf16.mxu0 0
    %1681 = vmatpush1.bf16.msra.mxu0 0
    %1682 = vmatprep.subr.bf16.mxu0 0
    %1683 = vmatpush1.bf16.msra.mxu0 0
    %1684 = vmatprep.subr.bf16.mxu0 0
    %1685 = vmatpush1.bf16.msra.mxu0 0
    %1686 = vmatprep.subr.bf16.mxu0 0
    %1687 = vmatpush1.bf16.msra.mxu0 0
    %1688 = vmatprep.subr.bf16.mxu0 0
    %1689 = vmatpush1.bf16.msra.mxu0 0
    %1690 = vmatprep.subr.bf16.mxu0 0
    %1691 = vmatpush1.bf16.msra.mxu0 0
    %1692 = vmatprep.subr.bf16.mxu0 0
    %1693 = vmatpush1.bf16.msra.mxu0 0
    %1694 = vmatprep.subr.bf16.mxu0 0
    %1695 = vmatpush1.bf16.msra.mxu0 0
    %1696 = vmatprep.subr.bf16.mxu0 0
    %1697 = vmatpush1.bf16.msra.mxu0 0
    %1698 = vmatprep.subr.bf16.mxu0 0
    %1699 = vmatpush1.bf16.msra.mxu0 0
    %1700 = vmatprep.subr.bf16.mxu0 0
    %1701 = vmatpush1.bf16.msra.mxu0 0
    %1702 = vmatprep.subr.bf16.mxu0 0
    %1703 = vmatpush1.bf16.msra.mxu0 0
    %1704 = vmatprep.subr.bf16.mxu0 0
    %1705 = vmatpush1.bf16.msra.mxu0 0
    %1706 = vmatprep.mubr.bf16.mxu0 0
    %1707 = vmatmul.mubr.bf16.gmra.mrb[0].mxu0 %v1672
    %v1708 = vpop.f32.mrb[0].mxu0
    %v1709 = vadd.f32 %v1657, %v1708
    %v1710 = vpop.f32.mrb[0].mxu0
    %v1711 = vpop.f32.mrb[0].mxu0
    %v1712 = vadd.f32 %v1657, %v1711
    %v1713 = vpop.f32.mrb[0].mxu0
    %1714 = vdwg.mxu0
    %v1715 = vmul.f32 %v1709, 0.5
    %v1716 = vmul.f32 %v1712, 0.5
    %v1717 = vmul.f32 %v1709, 0.70710677
    %v1718 = vmul.f32 %v1712, 0.70710677
    %v1719 = verf.f32.pop %v1717
    %v1720 = verf.f32.pop %v1718
    %v1721 = vadd.f32 %v1719, 1.0
    %v1722 = vadd.f32 %v1720, 1.0
    %v1723 = vmul.f32 %v1715, %v1721
    %v1724 = vmul.f32 %v1716, %v1722
    %v1725 = vpack.c.bf16 %v1724, %v1723
    %v1726 = vld [vmem:[%s10] sm:$0xf]
    %v1727 = vld [vmem:[%s10 + $0x4] sm:$0xf]
    %v1728 = vld [vmem:[%s10 + $0x8] sm:$0xf]
    %v1729 = vld [vmem:[%s10 + $0xc] sm:$0xf]
    %v1730 = vld [vmem:[%s10 + $0x10] sm:$0xf]
    %v1731 = vld [vmem:[%s10 + $0x14] sm:$0xf]
    %v1732 = vld [vmem:[%s10 + $0x18] sm:$0xf]
    %v1733 = vld [vmem:[%s10 + $0x1c] sm:$0xf]
    %v1734 = vld [vmem:[%s10 + $0x20] sm:$0xf]
    %v1735 = vld [vmem:[%s10 + $0x24] sm:$0xf]
    %v1736 = vld [vmem:[%s10 + $0x28] sm:$0xf]
    %v1737 = vld [vmem:[%s10 + $0x2c] sm:$0xf]
    %v1738 = vld [vmem:[%s10 + $0x30] sm:$0xf]
    %v1739 = vld [vmem:[%s10 + $0x34] sm:$0xf]
    %v1740 = vld [vmem:[%s10 + $0x38] sm:$0xf]
    %v1741 = vld [vmem:[%s10 + $0x3c] sm:$0xf]
    %v1742 = vld [vmem:[%s11] sm:$0x1]
    %v1744 = vlaneseq
    %v1745 = vshrl.u32 %v1744, 7
    %v1746 = vsub.s32 0, %v1745
    %v1747 = vrot.slane %v1742, %v1746
    %v1765 = vunpack.c.l.b16 %v1726
    %v1766 = vunpack.c.l.b16 %v1727
    %v1767 = vunpack.c.l.b16 %v1728
    %v1768 = vunpack.c.l.b16 %v1729
    %v1769 = vunpack.c.l.b16 %v1730
    %v1770 = vunpack.c.l.b16 %v1731
    %v1771 = vunpack.c.l.b16 %v1732
    %v1772 = vunpack.c.l.b16 %v1733
    %v1773 = vunpack.c.l.b16 %v1734
    %v1774 = vunpack.c.l.b16 %v1735
    %v1775 = vunpack.c.l.b16 %v1736
    %v1776 = vunpack.c.l.b16 %v1737
    %v1777 = vunpack.c.l.b16 %v1738
    %v1778 = vunpack.c.l.b16 %v1739
    %v1779 = vunpack.c.l.b16 %v1740
    %v1780 = vunpack.c.l.b16 %v1741
    %v1781 = vpack.c.b16 %v1766, %v1765
    %v1782 = vpack.c.b16 %v1768, %v1767
    %v1783 = vpack.c.b16 %v1770, %v1769
    %v1784 = vpack.c.b16 %v1772, %v1771
    %v1785 = vpack.c.b16 %v1774, %v1773
    %v1786 = vpack.c.b16 %v1776, %v1775
    %v1787 = vpack.c.b16 %v1778, %v1777
    %v1788 = vpack.c.b16 %v1780, %v1779
    %1797 = vmatprep.subr.bf16.mxu0 0
    %1798 = vmatpush1.bf16.msra.mxu0 %v1781
    %1799 = vmatprep.subr.bf16.mxu0 0
    %1800 = vmatpush1.bf16.msra.mxu0 %v1782
    %1801 = vmatprep.subr.bf16.mxu0 0
    %1802 = vmatpush1.bf16.msra.mxu0 %v1783
    %1803 = vmatprep.subr.bf16.mxu0 0
    %1804 = vmatpush1.bf16.msra.mxu0 %v1784
    %1805 = vmatprep.subr.bf16.mxu0 0
    %1806 = vmatpush1.bf16.msra.mxu0 %v1785
    %1807 = vmatprep.subr.bf16.mxu0 0
    %1808 = vmatpush1.bf16.msra.mxu0 %v1786
    %1809 = vmatprep.subr.bf16.mxu0 0
    %1810 = vmatpush1.bf16.msra.mxu0 %v1787
    %1811 = vmatprep.subr.bf16.mxu0 0
    %1812 = vmatpush1.bf16.msra.mxu0 %v1788
    %1813 = vmatprep.subr.bf16.mxu0 0
    %1814 = vmatpush1.bf16.msra.mxu0 0
    %1815 = vmatprep.subr.bf16.mxu0 0
    %1816 = vmatpush1.bf16.msra.mxu0 0
    %1817 = vmatprep.subr.bf16.mxu0 0
    %1818 = vmatpush1.bf16.msra.mxu0 0
    %1819 = vmatprep.subr.bf16.mxu0 0
    %1820 = vmatpush1.bf16.msra.mxu0 0
    %1821 = vmatprep.subr.bf16.mxu0 0
    %1822 = vmatpush1.bf16.msra.mxu0 0
    %1823 = vmatprep.subr.bf16.mxu0 0
    %1824 = vmatpush1.bf16.msra.mxu0 0
    %1825 = vmatprep.subr.bf16.mxu0 0
    %1826 = vmatpush1.bf16.msra.mxu0 0
    %1827 = vmatprep.subr.bf16.mxu0 0
    %1828 = vmatpush1.bf16.msra.mxu0 0
    %1829 = vmatprep.mubr.bf16.mxu0 0
    %1830 = vmatmul.mubr.bf16.gmra.mrb[0].mxu0 %v1725
    %v1831 = vpop.f32.mrb[0].mxu0
    %v1832 = vadd.f32 %v1747, %v1831
    %v1833 = vpop.f32.mrb[0].mxu0
    %v1834 = vpop.f32.mrb[0].mxu0
    %v1835 = vadd.f32 %v1747, %v1834
    %v1836 = vpop.f32.mrb[0].mxu0
    %1837 = vdwg.mxu0
    %v1838 = vadd.f32 %v1601, %v1832
    %v1839 = vadd.f32 %v1602, %v1835
    %1840 = vst.msk [vmem:[#allocation4] sm:$0xff] %vm45, %v1838
    %1841 = vst.msk [vmem:[#allocation4 + $0x8] sm:$0xff] %vm45, %v1839
    // Predicated region
    $region50: #{block_forward_pallas.1} parent=1 // pred_check
      _
    $region51: #{block_forward_pallas.1} parent=1 // pred_check_branch
      %1843 = sbr.rel (0) target = $region53
    $region52: #{block_forward_pallas.1} parent=1 // pred_region
      %s1845 = ssub.s32 256, 256
      %1846 = vsyncadd [#allocation5], %s1845
      %s1847 = sshll.u32 [#allocation4], 4
      %s1848 = int_to_ptr.vmem [resolvable:$true] %s1847
      %1853 = dma.vmem_to_hbm [thread:$0]  %s1848, 256, %s12, [#allocation5], 128, 128, 8
    $region53: #{block_forward_pallas.1} parent=1 // pred_fallthru
      _
    // Predicated region
    $region54: #{block_forward_pallas.1} parent=1 // pred_check
      _
    $region55: #{block_forward_pallas.1} parent=1 // pred_check_branch
      %1855 = sbr.rel (0) target = $region57
    $region56: #{block_forward_pallas.1} parent=1 // pred_region
      %1856 = dma.done [#allocation5], 256
    $region57: #{block_forward_pallas.1} parent=1 // pred_fallthru
      _
    %1857 = vsyncpa [#allocation5], 1

</llo_original>
